<compile_context>
chip_gen: v6e
topology: v6e:2x2x1
jax: 0.10.0
libtpu: 0.0.40
codegen_flags: <defaults>
</compile_context>

<pallas_src>
import jax
import jax.numpy as jnp
from jax.experimental import pallas as pl
from jax.experimental.pallas import tpu as pltpu

K = 3
IN_N = 2           # self._inputN
HID_M = 2000       # self._outputM
OUT_O = K          # self._outputO

HID_PAD = 2048     # hidden padded to a multiple of 128 lanes (16 full vregs)
ACC_PAD = 128      # in-kernel accumulator / W2 lane padding (MXU-aligned)
CHUNK = 512        # hidden chunk per inner step
N_CHUNKS = HID_PAD // CHUNK
TM_MAX = 1024      # rows per grid step; ~10 MiB VMEM working set at tm=1024


def mlp_kernel(x_ref, w1_ref, b1_ref, w2_ref, b2_ref, o_ref):
    tm = o_ref.shape[0]
    x = x_ref[...]                                   # [tm, 2] f32

    # Hoisted lane-broadcasts: one per input column, reused by every chunk.
    x0b = jnp.broadcast_to(x[:, 0:1], (tm, CHUNK))
    x1b = jnp.broadcast_to(x[:, 1:2], (tm, CHUNK))

    acc = jnp.zeros((tm, ACC_PAD), jnp.float32)
    # Linear1 on the VPU (contraction dim is only 2 -> MXU would be wasteful),
    # fused bias + ReLU, then a chunked MXU matmul for Linear2 so the full
    # [tm, 2048] activation never has to live in VMEM at once.
    for c in range(N_CHUNKS):                        # static unroll, aligned slices
        lo = c * CHUNK
        w1c = w1_ref[:, lo:lo + CHUNK]               # [2, CHUNK]
        h = x0b * w1c[0:1, :] + x1b * w1c[1:2, :] + b1_ref[:, lo:lo + CHUNK]
        h = jnp.maximum(h, 0.0)                      # [tm, CHUNK] f32
        acc = acc + jnp.dot(h.astype(w2_ref.dtype),  # bf16 (or f32) operands
                            w2_ref[lo:lo + CHUNK, :],
                            preferred_element_type=jnp.float32)

    # Store only the 3 real output columns -> tiny HBM writeback, no external
    # column-slice kernel needed afterwards.
    o_ref[...] = (acc[:, :OUT_O] + b2_ref[...]).astype(o_ref.dtype)


def prepare_params(w1, b1, w2, b2, *, matmul_dtype=jnp.bfloat16):
    """One-time padding/casting of the weights (hoisted out of the forward)."""
    w1p = jnp.zeros((IN_N, HID_PAD), jnp.float32).at[:, :HID_M].set(w1)
    b1p = jnp.zeros((1, HID_PAD), jnp.float32).at[0, :HID_M].set(b1)
    w2p = (jnp.zeros((HID_PAD, ACC_PAD), jnp.float32)
           .at[:HID_M, :OUT_O].set(w2)).astype(matmul_dtype)
    b2p = b2.reshape(1, OUT_O).astype(jnp.float32)
    return w1p, b1p, w2p, b2p


def net_forward(x, params, *, tm=None):
    """x: [B, 2] f32 -> [B, 3] f32.  Fused Linear -> ReLU -> Linear."""
    w1p, b1p, w2p, b2p = params
    B, n_in = x.shape
    assert n_in == IN_N

    if tm is None:
        # One fat tile for small batches (no wasteful split on single-TC
        # v5e/v6e); large batches get many grid steps anyway, which v7x's two
        # TensorCores pick up via the "parallel" dimension semantics.
        tm = min(TM_MAX, ((B + 7) // 8) * 8)
    tm = max(8, (tm // 8) * 8)

    # pad batch to a multiple of tm (handles arbitrary batch sizes)
    B_pad = ((B + tm - 1) // tm) * tm
    if B_pad != B:
        x = jnp.pad(x, ((0, B_pad - B), (0, 0)))

    grid = (B_pad // tm,)
    out = pl.pallas_call(
        mlp_kernel,
        out_shape=jax.ShapeDtypeStruct((B_pad, OUT_O), jnp.float32),
        grid_spec=pltpu.PrefetchScalarGridSpec(
            num_scalar_prefetch=0,
            grid=grid,
            in_specs=[
                pl.BlockSpec((tm, IN_N), lambda i: (i, 0)),          # x tile
                pl.BlockSpec((IN_N, HID_PAD), lambda i: (0, 0)),     # W1 (resident)
                pl.BlockSpec((1, HID_PAD), lambda i: (0, 0)),        # b1
                pl.BlockSpec((HID_PAD, ACC_PAD), lambda i: (0, 0)),  # W2 (resident)
                pl.BlockSpec((1, OUT_O), lambda i: (0, 0)),          # b2 (unpadded)
            ],
            out_specs=pl.BlockSpec((tm, OUT_O), lambda i: (i, 0)),
        ),
        compiler_params=pltpu.CompilerParams(
            dimension_semantics=("parallel",),
            vmem_limit_bytes=32 * 1024 * 1024,
        ),
    )(x, w1p, b1p, w2p, b2p)

    return out[:B]   # row slice only; columns are already exactly OUT_O


def init_params(key):
    """Deterministic init mimicking torch.nn.Linear's U(-1/sqrt(fan_in), 1/sqrt(fan_in))."""
    k1, k2, k3, k4 = jax.random.split(key, 4)
    bound1 = 1.0 / (IN_N ** 0.5)
    bound2 = 1.0 / (HID_M ** 0.5)
    # stored as (in, out) == transpose of PyTorch's (out, in) weight
    w1 = jax.random.uniform(k1, (IN_N, HID_M), jnp.float32, -bound1, bound1)
    b1 = jax.random.uniform(k2, (HID_M,), jnp.float32, -bound1, bound1)
    w2 = jax.random.uniform(k3, (HID_M, OUT_O), jnp.float32, -bound2, bound2)
    b2 = jax.random.uniform(k4, (OUT_O,), jnp.float32, -bound2, bound2)
    return w1, b1, w2, b2


if __name__ == "__main__":
    key = jax.random.PRNGKey(0)
    kx, kp = jax.random.split(key)
    B = 64
    x = jax.random.normal(kx, (B, IN_N), jnp.float32)
    w1, b1, w2, b2 = init_params(kp)

    # pure-JAX f32 reference
    ref = jnp.maximum(x @ w1 + b1, 0.0) @ w2 + b2

    # Exact path (f32 MXU) -- must match the reference tightly.
    params_f32 = prepare_params(w1, b1, w2, b2, matmul_dtype=jnp.float32)
    out_f32 = jax.block_until_ready(net_forward(x, params_f32))
    assert out_f32.shape == (B, OUT_O)
    assert jnp.allclose(out_f32, ref, atol=1e-4, rtol=1e-4)

    # Fast path (bf16 operands, f32 accumulation) -- looser tolerance is
    # expected for a 2000-term reduction with bf16 operands.
    params_bf16 = prepare_params(w1, b1, w2, b2, matmul_dtype=jnp.bfloat16)
    out_bf16 = jax.block_until_ready(net_forward(x, params_bf16))
    assert out_bf16.shape == (B, OUT_O)
    assert jnp.allclose(out_bf16, ref, atol=2e-2, rtol=2e-2)

    print("KERNEL_OK")
</pallas_src>

<mosaic_0001>
module attributes {stable_mosaic.version = 11 : i64} {
  func.func @mlp_kernel(%arg0: i32, %arg1: memref<64x2xf32, #tpu.memory_space<vmem>>, %arg2: memref<2x2048xf32, #tpu.memory_space<vmem>>, %arg3: memref<1x2048xf32, #tpu.memory_space<vmem>>, %arg4: memref<2048x128xf32, #tpu.memory_space<vmem>>, %arg5: memref<1x3xf32, #tpu.memory_space<vmem>>, %arg6: memref<64x3xf32, #tpu.memory_space<vmem>>) attributes {dimension_semantics = [#tpu.dimension_semantics<parallel>], iteration_bounds = array<i64: 1>, scalar_prefetch = 0 : i64, scratch_operands = 0 : i64, tpu.core_type = #tpu.core_type<tc>, window_params = [{transform_indices = @transform_0, window_bounds = array<i64: 64, 2>}, {pipeline_mode = #tpu.pipeline_mode<synchronous>, transform_indices = @transform_1, window_bounds = array<i64: 2, 2048>}, {pipeline_mode = #tpu.pipeline_mode<synchronous>, transform_indices = @transform_2, window_bounds = array<i64: 1, 2048>}, {pipeline_mode = #tpu.pipeline_mode<synchronous>, transform_indices = @transform_3, window_bounds = array<i64: 2048, 128>}, {pipeline_mode = #tpu.pipeline_mode<synchronous>, transform_indices = @transform_4, window_bounds = array<i64: 1, 3>}, {transform_indices = @transform_5, window_bounds = array<i64: 64, 3>}]} {
    %c0 = arith.constant 0 : index
    %c0_0 = arith.constant 0 : index
    %0 = vector.load %arg1[%c0, %c0_0] : memref<64x2xf32, #tpu.memory_space<vmem>>, vector<64x2xf32>
    %1 = vector.extract_strided_slice %0 {offsets = [0, 0], sizes = [64, 1], strides = [1, 1]} : vector<64x2xf32> to vector<64x1xf32>
    %2 = vector.shape_cast %1 : vector<64x1xf32> to vector<64x1xf32>
    %3 = vector.broadcast %2 : vector<64x1xf32> to vector<64x512xf32>
    %4 = vector.extract_strided_slice %0 {offsets = [0, 1], sizes = [64, 1], strides = [1, 1]} : vector<64x2xf32> to vector<64x1xf32>
    %5 = vector.shape_cast %4 : vector<64x1xf32> to vector<64x1xf32>
    %6 = vector.broadcast %5 : vector<64x1xf32> to vector<64x512xf32>
    %cst = arith.constant 0.000000e+00 : f32
    %7 = vector.broadcast %cst : f32 to vector<64x128xf32>
    %c0_1 = arith.constant 0 : index
    %c0_2 = arith.constant 0 : index
    %8 = vector.load %arg2[%c0_1, %c0_2] : memref<2x2048xf32, #tpu.memory_space<vmem>>, vector<2x512xf32>
    %9 = vector.extract_strided_slice %8 {offsets = [0, 0], sizes = [1, 512], strides = [1, 1]} : vector<2x512xf32> to vector<1x512xf32>
    %10 = vector.broadcast %9 : vector<1x512xf32> to vector<64x512xf32>
    %11 = arith.mulf %3, %10 : vector<64x512xf32>
    %12 = vector.extract_strided_slice %8 {offsets = [1, 0], sizes = [1, 512], strides = [1, 1]} : vector<2x512xf32> to vector<1x512xf32>
    %13 = vector.broadcast %12 : vector<1x512xf32> to vector<64x512xf32>
    %14 = arith.mulf %6, %13 : vector<64x512xf32>
    %15 = arith.addf %11, %14 : vector<64x512xf32>
    %c0_3 = arith.constant 0 : index
    %c0_4 = arith.constant 0 : index
    %16 = vector.load %arg3[%c0_3, %c0_4] : memref<1x2048xf32, #tpu.memory_space<vmem>>, vector<1x512xf32>
    %17 = vector.broadcast %16 : vector<1x512xf32> to vector<64x512xf32>
    %18 = arith.addf %15, %17 : vector<64x512xf32>
    %cst_5 = arith.constant 0.000000e+00 : f32
    %19 = vector.broadcast %cst_5 : f32 to vector<64x512xf32>
    %20 = arith.maximumf %18, %19 : vector<64x512xf32>
    %c0_6 = arith.constant 0 : index
    %c0_7 = arith.constant 0 : index
    %21 = vector.load %arg4[%c0_6, %c0_7] : memref<2048x128xf32, #tpu.memory_space<vmem>>, vector<512x128xf32>
    %cst_8 = arith.constant dense<0.000000e+00> : vector<64x128xf32>
    %22 = tpu.matmul %20, %21, %cst_8 {dimension_numbers = #tpu.dot_dimension_numbers<[1], [0], [0], [1], [0, 0, 1, 1], [], []>} : vector<64x512xf32>, vector<512x128xf32>, vector<64x128xf32> -> vector<64x128xf32>
    %23 = arith.addf %7, %22 : vector<64x128xf32>
    %c0_9 = arith.constant 0 : index
    %c512 = arith.constant 512 : index
    %24 = vector.load %arg2[%c0_9, %c512] : memref<2x2048xf32, #tpu.memory_space<vmem>>, vector<2x512xf32>
    %25 = vector.extract_strided_slice %24 {offsets = [0, 0], sizes = [1, 512], strides = [1, 1]} : vector<2x512xf32> to vector<1x512xf32>
    %26 = vector.broadcast %25 : vector<1x512xf32> to vector<64x512xf32>
    %27 = arith.mulf %3, %26 : vector<64x512xf32>
    %28 = vector.extract_strided_slice %24 {offsets = [1, 0], sizes = [1, 512], strides = [1, 1]} : vector<2x512xf32> to vector<1x512xf32>
    %29 = vector.broadcast %28 : vector<1x512xf32> to vector<64x512xf32>
    %30 = arith.mulf %6, %29 : vector<64x512xf32>
    %31 = arith.addf %27, %30 : vector<64x512xf32>
    %c0_10 = arith.constant 0 : index
    %c512_11 = arith.constant 512 : index
    %32 = vector.load %arg3[%c0_10, %c512_11] : memref<1x2048xf32, #tpu.memory_space<vmem>>, vector<1x512xf32>
    %33 = vector.broadcast %32 : vector<1x512xf32> to vector<64x512xf32>
    %34 = arith.addf %31, %33 : vector<64x512xf32>
    %cst_12 = arith.constant 0.000000e+00 : f32
    %35 = vector.broadcast %cst_12 : f32 to vector<64x512xf32>
    %36 = arith.maximumf %34, %35 : vector<64x512xf32>
    %c512_13 = arith.constant 512 : index
    %c0_14 = arith.constant 0 : index
    %37 = vector.load %arg4[%c512_13, %c0_14] : memref<2048x128xf32, #tpu.memory_space<vmem>>, vector<512x128xf32>
    %cst_15 = arith.constant dense<0.000000e+00> : vector<64x128xf32>
    %38 = tpu.matmul %36, %37, %cst_15 {dimension_numbers = #tpu.dot_dimension_numbers<[1], [0], [0], [1], [0, 0, 1, 1], [], []>} : vector<64x512xf32>, vector<512x128xf32>, vector<64x128xf32> -> vector<64x128xf32>
    %39 = arith.addf %23, %38 : vector<64x128xf32>
    %c0_16 = arith.constant 0 : index
    %c1024 = arith.constant 1024 : index
    %40 = vector.load %arg2[%c0_16, %c1024] : memref<2x2048xf32, #tpu.memory_space<vmem>>, vector<2x512xf32>
    %41 = vector.extract_strided_slice %40 {offsets = [0, 0], sizes = [1, 512], strides = [1, 1]} : vector<2x512xf32> to vector<1x512xf32>
    %42 = vector.broadcast %41 : vector<1x512xf32> to vector<64x512xf32>
    %43 = arith.mulf %3, %42 : vector<64x512xf32>
    %44 = vector.extract_strided_slice %40 {offsets = [1, 0], sizes = [1, 512], strides = [1, 1]} : vector<2x512xf32> to vector<1x512xf32>
    %45 = vector.broadcast %44 : vector<1x512xf32> to vector<64x512xf32>
    %46 = arith.mulf %6, %45 : vector<64x512xf32>
    %47 = arith.addf %43, %46 : vector<64x512xf32>
    %c0_17 = arith.constant 0 : index
    %c1024_18 = arith.constant 1024 : index
    %48 = vector.load %arg3[%c0_17, %c1024_18] : memref<1x2048xf32, #tpu.memory_space<vmem>>, vector<1x512xf32>
    %49 = vector.broadcast %48 : vector<1x512xf32> to vector<64x512xf32>
    %50 = arith.addf %47, %49 : vector<64x512xf32>
    %cst_19 = arith.constant 0.000000e+00 : f32
    %51 = vector.broadcast %cst_19 : f32 to vector<64x512xf32>
    %52 = arith.maximumf %50, %51 : vector<64x512xf32>
    %c1024_20 = arith.constant 1024 : index
    %c0_21 = arith.constant 0 : index
    %53 = vector.load %arg4[%c1024_20, %c0_21] : memref<2048x128xf32, #tpu.memory_space<vmem>>, vector<512x128xf32>
    %cst_22 = arith.constant dense<0.000000e+00> : vector<64x128xf32>
    %54 = tpu.matmul %52, %53, %cst_22 {dimension_numbers = #tpu.dot_dimension_numbers<[1], [0], [0], [1], [0, 0, 1, 1], [], []>} : vector<64x512xf32>, vector<512x128xf32>, vector<64x128xf32> -> vector<64x128xf32>
    %55 = arith.addf %39, %54 : vector<64x128xf32>
    %c0_23 = arith.constant 0 : index
    %c1536 = arith.constant 1536 : index
    %56 = vector.load %arg2[%c0_23, %c1536] : memref<2x2048xf32, #tpu.memory_space<vmem>>, vector<2x512xf32>
    %57 = vector.extract_strided_slice %56 {offsets = [0, 0], sizes = [1, 512], strides = [1, 1]} : vector<2x512xf32> to vector<1x512xf32>
    %58 = vector.broadcast %57 : vector<1x512xf32> to vector<64x512xf32>
    %59 = arith.mulf %3, %58 : vector<64x512xf32>
    %60 = vector.extract_strided_slice %56 {offsets = [1, 0], sizes = [1, 512], strides = [1, 1]} : vector<2x512xf32> to vector<1x512xf32>
    %61 = vector.broadcast %60 : vector<1x512xf32> to vector<64x512xf32>
    %62 = arith.mulf %6, %61 : vector<64x512xf32>
    %63 = arith.addf %59, %62 : vector<64x512xf32>
    %c0_24 = arith.constant 0 : index
    %c1536_25 = arith.constant 1536 : index
    %64 = vector.load %arg3[%c0_24, %c1536_25] : memref<1x2048xf32, #tpu.memory_space<vmem>>, vector<1x512xf32>
    %65 = vector.broadcast %64 : vector<1x512xf32> to vector<64x512xf32>
    %66 = arith.addf %63, %65 : vector<64x512xf32>
    %cst_26 = arith.constant 0.000000e+00 : f32
    %67 = vector.broadcast %cst_26 : f32 to vector<64x512xf32>
    %68 = arith.maximumf %66, %67 : vector<64x512xf32>
    %c1536_27 = arith.constant 1536 : index
    %c0_28 = arith.constant 0 : index
    %69 = vector.load %arg4[%c1536_27, %c0_28] : memref<2048x128xf32, #tpu.memory_space<vmem>>, vector<512x128xf32>
    %cst_29 = arith.constant dense<0.000000e+00> : vector<64x128xf32>
    %70 = tpu.matmul %68, %69, %cst_29 {dimension_numbers = #tpu.dot_dimension_numbers<[1], [0], [0], [1], [0, 0, 1, 1], [], []>} : vector<64x512xf32>, vector<512x128xf32>, vector<64x128xf32> -> vector<64x128xf32>
    %71 = arith.addf %55, %70 : vector<64x128xf32>
    %72 = vector.extract_strided_slice %71 {offsets = [0, 0], sizes = [64, 3], strides = [1, 1]} : vector<64x128xf32> to vector<64x3xf32>
    %c0_30 = arith.constant 0 : index
    %c0_31 = arith.constant 0 : index
    %73 = vector.load %arg5[%c0_30, %c0_31] : memref<1x3xf32, #tpu.memory_space<vmem>>, vector<1x3xf32>
    %74 = vector.broadcast %73 : vector<1x3xf32> to vector<64x3xf32>
    %75 = arith.addf %72, %74 : vector<64x3xf32>
    %c0_32 = arith.constant 0 : index
    %c0_33 = arith.constant 0 : index
    %76 = vector.load %arg6[%c0_32, %c0_33] : memref<64x3xf32, #tpu.memory_space<vmem>>, vector<64x3xf32>
    tpu.vector_store %arg6[%c0_32, %c0_33], %75 {strides = array<i32>} : memref<64x3xf32, #tpu.memory_space<vmem>>, vector<64x3xf32>,
    return
  }
  func.func @transform_0(%arg0: i32) -> (i32, i32) {
    %c0_i32 = arith.constant 0 : i32
    %c0_i32_0 = arith.constant 0 : i32
    return %arg0, %c0_i32 : i32, i32
  }
  func.func @transform_1(%arg0: i32) -> (i32, i32) {
    %c0_i32 = arith.constant 0 : i32
    %c0_i32_0 = arith.constant 0 : i32
    %c0_i32_1 = arith.constant 0 : i32
    return %c0_i32, %c0_i32_0 : i32, i32
  }
  func.func @transform_2(%arg0: i32) -> (i32, i32) {
    %c0_i32 = arith.constant 0 : i32
    %c0_i32_0 = arith.constant 0 : i32
    %c0_i32_1 = arith.constant 0 : i32
    return %c0_i32, %c0_i32_0 : i32, i32
  }
  func.func @transform_3(%arg0: i32) -> (i32, i32) {
    %c0_i32 = arith.constant 0 : i32
    %c0_i32_0 = arith.constant 0 : i32
    %c0_i32_1 = arith.constant 0 : i32
    return %c0_i32, %c0_i32_0 : i32, i32
  }
  func.func @transform_4(%arg0: i32) -> (i32, i32) {
    %c0_i32 = arith.constant 0 : i32
    %c0_i32_0 = arith.constant 0 : i32
    %c0_i32_1 = arith.constant 0 : i32
    return %c0_i32, %c0_i32_0 : i32, i32
  }
  func.func @transform_5(%arg0: i32) -> (i32, i32) {
    %c0_i32 = arith.constant 0 : i32
    %c0_i32_0 = arith.constant 0 : i32
    return %arg0, %c0_i32 : i32, i32
  }
}

</mosaic_0001>

<llo_original>
// kernel: tpu_custom_call.1
$region0: #{tpu_custom_call.1}
  #allocation0 [shape = 'u32[]', space=smem, size = 0x4, offset = 0x4, fixed_abs, tag = 'smem constant byte address 0x4 - core index']
  #allocation1 [shape = 'u32[144,128]{1,0:T(1,128)}', space=vmem, size = 0x12000, scoped, tag = 'internal scratch']
  %s0 = inlined_call_operand.vmem [shape: f32[64,2], index: 0, kind: input, shape index: {}]
  %s1 = inlined_call_operand.vmem [shape: f32[2,2048], index: 1, kind: input, shape index: {}]
  %s2 = inlined_call_operand.vmem [shape: f32[1,2048], index: 2, kind: input, shape index: {}]
  %s3 = inlined_call_operand.hbm [shape: f32[2048,128], index: 3, kind: input, shape index: {}]
  %s4 = inlined_call_operand.vmem [shape: f32[1,3], index: 4, kind: input, shape index: {}]
  %s5 = inlined_call_operand.vmem [shape: f32[64,3], index: 5, kind: output, shape index: {}]
  %s6 = sld [smem:[#allocation0]]
  $region34: #{tpu_custom_call.1} parent=0
    _
  %s8 = ssub.s32 1, %s6
  %s9 = scalar_select 0, %s8, %s6
  $region1: #{tpu_custom_call.1} parent=0
    #allocation2 [shape = 'u8[1048576]{0}', space=vmem, size = 0x100000, scoped, tag = 'input window, operand 3, single buffered']
    #allocation3 [shape = 's32[1]{0}', space=sflag, size = 0x4, scoped, tag = 'scoped memory for tpu_custom_call.1']
    %10 = vsyncpa [#allocation3], 0
    // Predicated region
    $region2: #{tpu_custom_call.1} parent=1 // pred_check
      _
    $region3: #{tpu_custom_call.1} parent=1 // pred_check_branch
      %12 = sbr.rel (0) target = $region5
    $region4: #{tpu_custom_call.1} parent=1 // pred_region
      _
    $region5: #{tpu_custom_call.1} parent=1 // pred_fallthru
      _
    // Predicated region
    $region6: #{tpu_custom_call.1} parent=1 // pred_check
      _
    $region7: #{tpu_custom_call.1} parent=1 // pred_check_branch
      %14 = sbr.rel (0) target = $region9
    $region8: #{tpu_custom_call.1} parent=1 // pred_region
      _
    $region9: #{tpu_custom_call.1} parent=1 // pred_fallthru
      _
    // Predicated region
    $region10: #{tpu_custom_call.1} parent=1 // pred_check
      _
    $region11: #{tpu_custom_call.1} parent=1 // pred_check_branch
      %16 = sbr.rel (0) target = $region13
    $region12: #{tpu_custom_call.1} parent=1 // pred_region
      _
    $region13: #{tpu_custom_call.1} parent=1 // pred_fallthru
      _
    // Predicated region
    $region14: #{tpu_custom_call.1} parent=1 // pred_check
      _
    $region15: #{tpu_custom_call.1} parent=1 // pred_check_branch
      %18 = sbr.rel (0) target = $region17
    $region16: #{tpu_custom_call.1} parent=1 // pred_region
      %s20 = ssub.s32 32768, 32768
      %21 = vsyncadd [#allocation3], %s20
      %s22 = sshll.u32 [#allocation2], 4
      %s23 = int_to_ptr.vmem [resolvable:$true] %s22
      %28 = dma.hbm_to_vmem [thread:$0]  %s3, 32768, %s23, [#allocation3], 128, 128, 8
    $region17: #{tpu_custom_call.1} parent=1 // pred_fallthru
      _
    // Predicated region
    $region18: #{tpu_custom_call.1} parent=1 // pred_check
      _
    $region19: #{tpu_custom_call.1} parent=1 // pred_check_branch
      %30 = sbr.rel (0) target = $region21
    $region20: #{tpu_custom_call.1} parent=1 // pred_region
      _
    $region21: #{tpu_custom_call.1} parent=1 // pred_fallthru
      _
    // Predicated region
    $region22: #{tpu_custom_call.1} parent=1 // pred_check
      _
    $region23: #{tpu_custom_call.1} parent=1 // pred_check_branch
      %32 = sbr.rel (0) target = $region25
    $region24: #{tpu_custom_call.1} parent=1 // pred_region
      %33 = dma.done [#allocation3], 32768
    $region25: #{tpu_custom_call.1} parent=1 // pred_fallthru
      _
    %v34 = vld [vmem:[%s0] sm:$0xff]
    %v35 = vld [vmem:[%s0 + $0x8] sm:$0xff]
    %v36 = vld [vmem:[%s0 + $0x10] sm:$0xff]
    %v37 = vld [vmem:[%s0 + $0x18] sm:$0xff]
    %v38 = vld [vmem:[%s0 + $0x20] sm:$0xff]
    %v39 = vld [vmem:[%s0 + $0x28] sm:$0xff]
    %v40 = vld [vmem:[%s0 + $0x30] sm:$0xff]
    %v41 = vld [vmem:[%s0 + $0x38] sm:$0xff]
    %43 = vset.pattern.permute.xlu0 0
    %44 = vperm.xlu0 %43, %v34
    %v45 = vpop.permute.xlu0 %44
    %48 = vset.pattern.permute.xlu0 0
    %49 = vperm.xlu0 %48, %v35
    %v50 = vpop.permute.xlu0 %49
    %53 = vset.pattern.permute.xlu0 0
    %54 = vperm.xlu0 %53, %v36
    %v55 = vpop.permute.xlu0 %54
    %58 = vset.pattern.permute.xlu0 0
    %59 = vperm.xlu0 %58, %v37
    %v60 = vpop.permute.xlu0 %59
    %63 = vset.pattern.permute.xlu0 0
    %64 = vperm.xlu0 %63, %v38
    %v65 = vpop.permute.xlu0 %64
    %68 = vset.pattern.permute.xlu0 0
    %69 = vperm.xlu0 %68, %v39
    %v70 = vpop.permute.xlu0 %69
    %73 = vset.pattern.permute.xlu0 0
    %74 = vperm.xlu0 %73, %v40
    %v75 = vpop.permute.xlu0 %74
    %78 = vset.pattern.permute.xlu0 0
    %79 = vperm.xlu0 %78, %v41
    %v80 = vpop.permute.xlu0 %79
    %82 = vset.pattern.permute.xlu0 1
    %83 = vperm.xlu0 %82, %v34
    %v84 = vpop.permute.xlu0 %83
    %86 = vset.pattern.permute.xlu0 1
    %87 = vperm.xlu0 %86, %v35
    %v88 = vpop.permute.xlu0 %87
    %90 = vset.pattern.permute.xlu0 1
    %91 = vperm.xlu0 %90, %v36
    %v92 = vpop.permute.xlu0 %91
    %94 = vset.pattern.permute.xlu0 1
    %95 = vperm.xlu0 %94, %v37
    %v96 = vpop.permute.xlu0 %95
    %98 = vset.pattern.permute.xlu0 1
    %99 = vperm.xlu0 %98, %v38
    %v100 = vpop.permute.xlu0 %99
    %102 = vset.pattern.permute.xlu0 1
    %103 = vperm.xlu0 %102, %v39
    %v104 = vpop.permute.xlu0 %103
    %106 = vset.pattern.permute.xlu0 1
    %107 = vperm.xlu0 %106, %v40
    %v108 = vpop.permute.xlu0 %107
    %110 = vset.pattern.permute.xlu0 1
    %111 = vperm.xlu0 %110, %v41
    %v112 = vpop.permute.xlu0 %111
    %v114 = vld [vmem:[%s1] sm:$0xff]
    %v116 = vlaneseq
    %v117 = vshrl.u32 %v116, 7
    %v118 = vsub.s32 0, %v117
    %v119 = vrot.slane %v114, %v118
    %v120 = vlaneseq
    %v121 = vshrl.u32 %v120, 7
    %v122 = vsub.s32 2, %v121
    %v123 = vrot.slane %v114, %v122
    %v124 = vlaneseq
    %v125 = vshrl.u32 %v124, 7
    %v126 = vsub.s32 4, %v125
    %v127 = vrot.slane %v114, %v126
    %v128 = vlaneseq
    %v129 = vshrl.u32 %v128, 7
    %v130 = vsub.s32 6, %v129
    %v131 = vrot.slane %v114, %v130
    %v136 = vlaneseq
    %v137 = vshrl.u32 %v136, 7
    %v138 = vsub.s32 0, %v137
    %v139 = vrot.slane %v119, %v138
    %v140 = vlaneseq
    %v141 = vshrl.u32 %v140, 7
    %v142 = vsub.s32 0, %v141
    %v143 = vrot.slane %v123, %v142
    %v144 = vlaneseq
    %v145 = vshrl.u32 %v144, 7
    %v146 = vsub.s32 0, %v145
    %v147 = vrot.slane %v127, %v146
    %v148 = vlaneseq
    %v149 = vshrl.u32 %v148, 7
    %v150 = vsub.s32 0, %v149
    %v151 = vrot.slane %v131, %v150
    %v152 = vmul.f32 %v45, %v139
    %v153 = vmul.f32 %v45, %v143
    %v154 = vmul.f32 %v45, %v147
    %v155 = vmul.f32 %v45, %v151
    %v156 = vmul.f32 %v50, %v139
    %v157 = vmul.f32 %v50, %v143
    %v158 = vmul.f32 %v50, %v147
    %v159 = vmul.f32 %v50, %v151
    %v160 = vmul.f32 %v55, %v139
    %v161 = vmul.f32 %v55, %v143
    %v162 = vmul.f32 %v55, %v147
    %v163 = vmul.f32 %v55, %v151
    %v164 = vmul.f32 %v60, %v139
    %v165 = vmul.f32 %v60, %v143
    %v166 = vmul.f32 %v60, %v147
    %v167 = vmul.f32 %v60, %v151
    %v168 = vmul.f32 %v65, %v139
    %v169 = vmul.f32 %v65, %v143
    %v170 = vmul.f32 %v65, %v147
    %v171 = vmul.f32 %v65, %v151
    %v172 = vmul.f32 %v70, %v139
    %v173 = vmul.f32 %v70, %v143
    %v174 = vmul.f32 %v70, %v147
    %v175 = vmul.f32 %v70, %v151
    %v176 = vmul.f32 %v75, %v139
    %v177 = vmul.f32 %v75, %v143
    %v178 = vmul.f32 %v75, %v147
    %v179 = vmul.f32 %v75, %v151
    %v180 = vmul.f32 %v80, %v139
    %v181 = vmul.f32 %v80, %v143
    %v182 = vmul.f32 %v80, %v147
    %v183 = vmul.f32 %v80, %v151
    %v184 = vlaneseq
    %v185 = vshrl.u32 %v184, 7
    %v186 = vsub.s32 1, %v185
    %v187 = vrot.slane %v114, %v186
    %v188 = vlaneseq
    %v189 = vshrl.u32 %v188, 7
    %v190 = vsub.s32 3, %v189
    %v191 = vrot.slane %v114, %v190
    %v192 = vlaneseq
    %v193 = vshrl.u32 %v192, 7
    %v194 = vsub.s32 5, %v193
    %v195 = vrot.slane %v114, %v194
    %v196 = vlaneseq
    %v197 = vshrl.u32 %v196, 7
    %v198 = vsub.s32 7, %v197
    %v199 = vrot.slane %v114, %v198
    %v204 = vlaneseq
    %v205 = vshrl.u32 %v204, 7
    %v206 = vsub.s32 1, %v205
    %v207 = vrot.slane %v187, %v206
    %v208 = vlaneseq
    %v209 = vshrl.u32 %v208, 7
    %v210 = vsub.s32 1, %v209
    %v211 = vrot.slane %v191, %v210
    %v212 = vlaneseq
    %v213 = vshrl.u32 %v212, 7
    %v214 = vsub.s32 1, %v213
    %v215 = vrot.slane %v195, %v214
    %v216 = vlaneseq
    %v217 = vshrl.u32 %v216, 7
    %v218 = vsub.s32 1, %v217
    %v219 = vrot.slane %v199, %v218
    %v220 = vmul.f32 %v84, %v207
    %v221 = vmul.f32 %v84, %v211
    %v222 = vmul.f32 %v84, %v215
    %v223 = vmul.f32 %v84, %v219
    %v224 = vmul.f32 %v88, %v207
    %v225 = vmul.f32 %v88, %v211
    %v226 = vmul.f32 %v88, %v215
    %v227 = vmul.f32 %v88, %v219
    %v228 = vmul.f32 %v92, %v207
    %v229 = vmul.f32 %v92, %v211
    %v230 = vmul.f32 %v92, %v215
    %v231 = vmul.f32 %v92, %v219
    %v232 = vmul.f32 %v96, %v207
    %v233 = vmul.f32 %v96, %v211
    %v234 = vmul.f32 %v96, %v215
    %v235 = vmul.f32 %v96, %v219
    %v236 = vmul.f32 %v100, %v207
    %v237 = vmul.f32 %v100, %v211
    %v238 = vmul.f32 %v100, %v215
    %v239 = vmul.f32 %v100, %v219
    %v240 = vmul.f32 %v104, %v207
    %v241 = vmul.f32 %v104, %v211
    %v242 = vmul.f32 %v104, %v215
    %v243 = vmul.f32 %v104, %v219
    %v244 = vmul.f32 %v108, %v207
    %v245 = vmul.f32 %v108, %v211
    %v246 = vmul.f32 %v108, %v215
    %v247 = vmul.f32 %v108, %v219
    %v248 = vmul.f32 %v112, %v207
    %v249 = vmul.f32 %v112, %v211
    %v250 = vmul.f32 %v112, %v215
    %v251 = vmul.f32 %v112, %v219
    %v252 = vadd.f32 %v152, %v220
    %v253 = vadd.f32 %v153, %v221
    %v254 = vadd.f32 %v154, %v222
    %v255 = vadd.f32 %v155, %v223
    %v256 = vadd.f32 %v156, %v224
    %v257 = vadd.f32 %v157, %v225
    %v258 = vadd.f32 %v158, %v226
    %v259 = vadd.f32 %v159, %v227
    %v260 = vadd.f32 %v160, %v228
    %v261 = vadd.f32 %v161, %v229
    %v262 = vadd.f32 %v162, %v230
    %v263 = vadd.f32 %v163, %v231
    %v264 = vadd.f32 %v164, %v232
    %v265 = vadd.f32 %v165, %v233
    %v266 = vadd.f32 %v166, %v234
    %v267 = vadd.f32 %v167, %v235
    %v268 = vadd.f32 %v168, %v236
    %v269 = vadd.f32 %v169, %v237
    %v270 = vadd.f32 %v170, %v238
    %v271 = vadd.f32 %v171, %v239
    %v272 = vadd.f32 %v172, %v240
    %v273 = vadd.f32 %v173, %v241
    %v274 = vadd.f32 %v174, %v242
    %v275 = vadd.f32 %v175, %v243
    %v276 = vadd.f32 %v176, %v244
    %v277 = vadd.f32 %v177, %v245
    %v278 = vadd.f32 %v178, %v246
    %v279 = vadd.f32 %v179, %v247
    %v280 = vadd.f32 %v180, %v248
    %v281 = vadd.f32 %v181, %v249
    %v282 = vadd.f32 %v182, %v250
    %v283 = vadd.f32 %v183, %v251
    %v284 = vld [vmem:[%s2] sm:$0xf]
    %v286 = vlaneseq
    %v287 = vshrl.u32 %v286, 7
    %v288 = vsub.s32 0, %v287
    %v289 = vrot.slane %v284, %v288
    %v290 = vlaneseq
    %v291 = vshrl.u32 %v290, 7
    %v292 = vsub.s32 1, %v291
    %v293 = vrot.slane %v284, %v292
    %v294 = vlaneseq
    %v295 = vshrl.u32 %v294, 7
    %v296 = vsub.s32 2, %v295
    %v297 = vrot.slane %v284, %v296
    %v298 = vlaneseq
    %v299 = vshrl.u32 %v298, 7
    %v300 = vsub.s32 3, %v299
    %v301 = vrot.slane %v284, %v300
    %v306 = vadd.f32 %v252, %v289
    %v307 = vadd.f32 %v253, %v293
    %v308 = vadd.f32 %v254, %v297
    %v309 = vadd.f32 %v255, %v301
    %v310 = vadd.f32 %v256, %v289
    %v311 = vadd.f32 %v257, %v293
    %v312 = vadd.f32 %v258, %v297
    %v313 = vadd.f32 %v259, %v301
    %v314 = vadd.f32 %v260, %v289
    %v315 = vadd.f32 %v261, %v293
    %v316 = vadd.f32 %v262, %v297
    %v317 = vadd.f32 %v263, %v301
    %v318 = vadd.f32 %v264, %v289
    %v319 = vadd.f32 %v265, %v293
    %v320 = vadd.f32 %v266, %v297
    %v321 = vadd.f32 %v267, %v301
    %v322 = vadd.f32 %v268, %v289
    %v323 = vadd.f32 %v269, %v293
    %v324 = vadd.f32 %v270, %v297
    %v325 = vadd.f32 %v271, %v301
    %v326 = vadd.f32 %v272, %v289
    %v327 = vadd.f32 %v273, %v293
    %v328 = vadd.f32 %v274, %v297
    %v329 = vadd.f32 %v275, %v301
    %v330 = vadd.f32 %v276, %v289
    %v331 = vadd.f32 %v277, %v293
    %v332 = vadd.f32 %v278, %v297
    %v333 = vadd.f32 %v279, %v301
    %v334 = vadd.f32 %v280, %v289
    %v335 = vadd.f32 %v281, %v293
    %v336 = vadd.f32 %v282, %v297
    %v337 = vadd.f32 %v283, %v301
    %v338 = vmax.f32 %v306, 0.0
    %v339 = vmax.f32 %v307, 0.0
    %v340 = vmax.f32 %v308, 0.0
    %v341 = vmax.f32 %v309, 0.0
    %v342 = vmax.f32 %v310, 0.0
    %v343 = vmax.f32 %v311, 0.0
    %v344 = vmax.f32 %v312, 0.0
    %v345 = vmax.f32 %v313, 0.0
    %v346 = vmax.f32 %v314, 0.0
    %v347 = vmax.f32 %v315, 0.0
    %v348 = vmax.f32 %v316, 0.0
    %v349 = vmax.f32 %v317, 0.0
    %v350 = vmax.f32 %v318, 0.0
    %v351 = vmax.f32 %v319, 0.0
    %v352 = vmax.f32 %v320, 0.0
    %v353 = vmax.f32 %v321, 0.0
    %v354 = vmax.f32 %v322, 0.0
    %v355 = vmax.f32 %v323, 0.0
    %v356 = vmax.f32 %v324, 0.0
    %v357 = vmax.f32 %v325, 0.0
    %v358 = vmax.f32 %v326, 0.0
    %v359 = vmax.f32 %v327, 0.0
    %v360 = vmax.f32 %v328, 0.0
    %v361 = vmax.f32 %v329, 0.0
    %v362 = vmax.f32 %v330, 0.0
    %v363 = vmax.f32 %v331, 0.0
    %v364 = vmax.f32 %v332, 0.0
    %v365 = vmax.f32 %v333, 0.0
    %v366 = vmax.f32 %v334, 0.0
    %v367 = vmax.f32 %v335, 0.0
    %v368 = vmax.f32 %v336, 0.0
    %v369 = vmax.f32 %v337, 0.0
    %v370 = vld [vmem:[#allocation2] sm:$0xff]
    %v371 = vld [vmem:[#allocation2 + $0x8] sm:$0xff]
    %v372 = vld [vmem:[#allocation2 + $0x10] sm:$0xff]
    %v373 = vld [vmem:[#allocation2 + $0x18] sm:$0xff]
    %v374 = vld [vmem:[#allocation2 + $0x20] sm:$0xff]
    %v375 = vld [vmem:[#allocation2 + $0x28] sm:$0xff]
    %v376 = vld [vmem:[#allocation2 + $0x30] sm:$0xff]
    %v377 = vld [vmem:[#allocation2 + $0x38] sm:$0xff]
    %v378 = vld [vmem:[#allocation2 + $0x40] sm:$0xff]
    %v379 = vld [vmem:[#allocation2 + $0x48] sm:$0xff]
    %v380 = vld [vmem:[#allocation2 + $0x50] sm:$0xff]
    %v381 = vld [vmem:[#allocation2 + $0x58] sm:$0xff]
    %v382 = vld [vmem:[#allocation2 + $0x60] sm:$0xff]
    %v383 = vld [vmem:[#allocation2 + $0x68] sm:$0xff]
    %v384 = vld [vmem:[#allocation2 + $0x70] sm:$0xff]
    %v385 = vld [vmem:[#allocation2 + $0x78] sm:$0xff]
    %v386 = vld [vmem:[#allocation2 + $0x80] sm:$0xff]
    %v387 = vld [vmem:[#allocation2 + $0x88] sm:$0xff]
    %v388 = vld [vmem:[#allocation2 + $0x90] sm:$0xff]
    %v389 = vld [vmem:[#allocation2 + $0x98] sm:$0xff]
    %v390 = vld [vmem:[#allocation2 + $0xa0] sm:$0xff]
    %v391 = vld [vmem:[#allocation2 + $0xa8] sm:$0xff]
    %v392 = vld [vmem:[#allocation2 + $0xb0] sm:$0xff]
    %v393 = vld [vmem:[#allocation2 + $0xb8] sm:$0xff]
    %v394 = vld [vmem:[#allocation2 + $0xc0] sm:$0xff]
    %v395 = vld [vmem:[#allocation2 + $0xc8] sm:$0xff]
    %v396 = vld [vmem:[#allocation2 + $0xd0] sm:$0xff]
    %v397 = vld [vmem:[#allocation2 + $0xd8] sm:$0xff]
    %v398 = vld [vmem:[#allocation2 + $0xe0] sm:$0xff]
    %v399 = vld [vmem:[#allocation2 + $0xe8] sm:$0xff]
    %v400 = vld [vmem:[#allocation2 + $0xf0] sm:$0xff]
    %v401 = vld [vmem:[#allocation2 + $0xf8] sm:$0xff]
    %v402 = vld [vmem:[#allocation2 + $0x100] sm:$0xff]
    %v403 = vld [vmem:[#allocation2 + $0x108] sm:$0xff]
    %v404 = vld [vmem:[#allocation2 + $0x110] sm:$0xff]
    %v405 = vld [vmem:[#allocation2 + $0x118] sm:$0xff]
    %v406 = vld [vmem:[#allocation2 + $0x120] sm:$0xff]
    %v407 = vld [vmem:[#allocation2 + $0x128] sm:$0xff]
    %v408 = vld [vmem:[#allocation2 + $0x130] sm:$0xff]
    %v409 = vld [vmem:[#allocation2 + $0x138] sm:$0xff]
    %v410 = vld [vmem:[#allocation2 + $0x140] sm:$0xff]
    %v411 = vld [vmem:[#allocation2 + $0x148] sm:$0xff]
    %v412 = vld [vmem:[#allocation2 + $0x150] sm:$0xff]
    %v413 = vld [vmem:[#allocation2 + $0x158] sm:$0xff]
    %v414 = vld [vmem:[#allocation2 + $0x160] sm:$0xff]
    %v415 = vld [vmem:[#allocation2 + $0x168] sm:$0xff]
    %v416 = vld [vmem:[#allocation2 + $0x170] sm:$0xff]
    %v417 = vld [vmem:[#allocation2 + $0x178] sm:$0xff]
    %v418 = vld [vmem:[#allocation2 + $0x180] sm:$0xff]
    %v419 = vld [vmem:[#allocation2 + $0x188] sm:$0xff]
    %v420 = vld [vmem:[#allocation2 + $0x190] sm:$0xff]
    %v421 = vld [vmem:[#allocation2 + $0x198] sm:$0xff]
    %v422 = vld [vmem:[#allocation2 + $0x1a0] sm:$0xff]
    %v423 = vld [vmem:[#allocation2 + $0x1a8] sm:$0xff]
    %v424 = vld [vmem:[#allocation2 + $0x1b0] sm:$0xff]
    %v425 = vld [vmem:[#allocation2 + $0x1b8] sm:$0xff]
    %v426 = vld [vmem:[#allocation2 + $0x1c0] sm:$0xff]
    %v427 = vld [vmem:[#allocation2 + $0x1c8] sm:$0xff]
    %v428 = vld [vmem:[#allocation2 + $0x1d0] sm:$0xff]
    %v429 = vld [vmem:[#allocation2 + $0x1d8] sm:$0xff]
    %v430 = vld [vmem:[#allocation2 + $0x1e0] sm:$0xff]
    %v431 = vld [vmem:[#allocation2 + $0x1e8] sm:$0xff]
    %v432 = vld [vmem:[#allocation2 + $0x1f0] sm:$0xff]
    %v433 = vld [vmem:[#allocation2 + $0x1f8] sm:$0xff]
    %v434 = vld [vmem:[%s1 + $0x8] sm:$0xff]
    %v436 = vlaneseq
    %v437 = vshrl.u32 %v436, 7
    %v438 = vsub.s32 0, %v437
    %v439 = vrot.slane %v434, %v438
    %v440 = vlaneseq
    %v441 = vshrl.u32 %v440, 7
    %v442 = vsub.s32 2, %v441
    %v443 = vrot.slane %v434, %v442
    %v444 = vlaneseq
    %v445 = vshrl.u32 %v444, 7
    %v446 = vsub.s32 4, %v445
    %v447 = vrot.slane %v434, %v446
    %v448 = vlaneseq
    %v449 = vshrl.u32 %v448, 7
    %v450 = vsub.s32 6, %v449
    %v451 = vrot.slane %v434, %v450
    %v456 = vlaneseq
    %v457 = vshrl.u32 %v456, 7
    %v458 = vsub.s32 0, %v457
    %v459 = vrot.slane %v439, %v458
    %v460 = vlaneseq
    %v461 = vshrl.u32 %v460, 7
    %v462 = vsub.s32 0, %v461
    %v463 = vrot.slane %v443, %v462
    %v464 = vlaneseq
    %v465 = vshrl.u32 %v464, 7
    %v466 = vsub.s32 0, %v465
    %v467 = vrot.slane %v447, %v466
    %v468 = vlaneseq
    %v469 = vshrl.u32 %v468, 7
    %v470 = vsub.s32 0, %v469
    %v471 = vrot.slane %v451, %v470
    %v472 = vmul.f32 %v45, %v459
    %v473 = vmul.f32 %v45, %v463
    %v474 = vmul.f32 %v45, %v467
    %v475 = vmul.f32 %v45, %v471
    %v476 = vmul.f32 %v50, %v459
    %v477 = vmul.f32 %v50, %v463
    %v478 = vmul.f32 %v50, %v467
    %v479 = vmul.f32 %v50, %v471
    %v480 = vmul.f32 %v55, %v459
    %v481 = vmul.f32 %v55, %v463
    %v482 = vmul.f32 %v55, %v467
    %v483 = vmul.f32 %v55, %v471
    %v484 = vmul.f32 %v60, %v459
    %v485 = vmul.f32 %v60, %v463
    %v486 = vmul.f32 %v60, %v467
    %v487 = vmul.f32 %v60, %v471
    %v488 = vmul.f32 %v65, %v459
    %v489 = vmul.f32 %v65, %v463
    %v490 = vmul.f32 %v65, %v467
    %v491 = vmul.f32 %v65, %v471
    %v492 = vmul.f32 %v70, %v459
    %v493 = vmul.f32 %v70, %v463
    %v494 = vmul.f32 %v70, %v467
    %v495 = vmul.f32 %v70, %v471
    %v496 = vmul.f32 %v75, %v459
    %v497 = vmul.f32 %v75, %v463
    %v498 = vmul.f32 %v75, %v467
    %v499 = vmul.f32 %v75, %v471
    %v500 = vmul.f32 %v80, %v459
    %v501 = vmul.f32 %v80, %v463
    %v502 = vmul.f32 %v80, %v467
    %v503 = vmul.f32 %v80, %v471
    %v504 = vlaneseq
    %v505 = vshrl.u32 %v504, 7
    %v506 = vsub.s32 1, %v505
    %v507 = vrot.slane %v434, %v506
    %v508 = vlaneseq
    %v509 = vshrl.u32 %v508, 7
    %v510 = vsub.s32 3, %v509
    %v511 = vrot.slane %v434, %v510
    %v512 = vlaneseq
    %v513 = vshrl.u32 %v512, 7
    %v514 = vsub.s32 5, %v513
    %v515 = vrot.slane %v434, %v514
    %v516 = vlaneseq
    %v517 = vshrl.u32 %v516, 7
    %v518 = vsub.s32 7, %v517
    %v519 = vrot.slane %v434, %v518
    %v524 = vlaneseq
    %v525 = vshrl.u32 %v524, 7
    %v526 = vsub.s32 1, %v525
    %v527 = vrot.slane %v507, %v526
    %v528 = vlaneseq
    %v529 = vshrl.u32 %v528, 7
    %v530 = vsub.s32 1, %v529
    %v531 = vrot.slane %v511, %v530
    %v532 = vlaneseq
    %v533 = vshrl.u32 %v532, 7
    %v534 = vsub.s32 1, %v533
    %v535 = vrot.slane %v515, %v534
    %v536 = vlaneseq
    %v537 = vshrl.u32 %v536, 7
    %v538 = vsub.s32 1, %v537
    %v539 = vrot.slane %v519, %v538
    %v540 = vmul.f32 %v84, %v527
    %v541 = vmul.f32 %v84, %v531
    %v542 = vmul.f32 %v84, %v535
    %v543 = vmul.f32 %v84, %v539
    %v544 = vmul.f32 %v88, %v527
    %v545 = vmul.f32 %v88, %v531
    %v546 = vmul.f32 %v88, %v535
    %v547 = vmul.f32 %v88, %v539
    %v548 = vmul.f32 %v92, %v527
    %v549 = vmul.f32 %v92, %v531
    %v550 = vmul.f32 %v92, %v535
    %v551 = vmul.f32 %v92, %v539
    %v552 = vmul.f32 %v96, %v527
    %v553 = vmul.f32 %v96, %v531
    %v554 = vmul.f32 %v96, %v535
    %v555 = vmul.f32 %v96, %v539
    %v556 = vmul.f32 %v100, %v527
    %v557 = vmul.f32 %v100, %v531
    %v558 = vmul.f32 %v100, %v535
    %v559 = vmul.f32 %v100, %v539
    %v560 = vmul.f32 %v104, %v527
    %v561 = vmul.f32 %v104, %v531
    %v562 = vmul.f32 %v104, %v535
    %v563 = vmul.f32 %v104, %v539
    %v564 = vmul.f32 %v108, %v527
    %v565 = vmul.f32 %v108, %v531
    %v566 = vmul.f32 %v108, %v535
    %v567 = vmul.f32 %v108, %v539
    %v568 = vmul.f32 %v112, %v527
    %v569 = vmul.f32 %v112, %v531
    %v570 = vmul.f32 %v112, %v535
    %v571 = vmul.f32 %v112, %v539
    %v572 = vadd.f32 %v472, %v540
    %v573 = vadd.f32 %v473, %v541
    %v574 = vadd.f32 %v474, %v542
    %v575 = vadd.f32 %v475, %v543
    %v576 = vadd.f32 %v476, %v544
    %v577 = vadd.f32 %v477, %v545
    %v578 = vadd.f32 %v478, %v546
    %v579 = vadd.f32 %v479, %v547
    %v580 = vadd.f32 %v480, %v548
    %v581 = vadd.f32 %v481, %v549
    %v582 = vadd.f32 %v482, %v550
    %v583 = vadd.f32 %v483, %v551
    %v584 = vadd.f32 %v484, %v552
    %v585 = vadd.f32 %v485, %v553
    %v586 = vadd.f32 %v486, %v554
    %v587 = vadd.f32 %v487, %v555
    %v588 = vadd.f32 %v488, %v556
    %v589 = vadd.f32 %v489, %v557
    %v590 = vadd.f32 %v490, %v558
    %v591 = vadd.f32 %v491, %v559
    %v592 = vadd.f32 %v492, %v560
    %v593 = vadd.f32 %v493, %v561
    %v594 = vadd.f32 %v494, %v562
    %v595 = vadd.f32 %v495, %v563
    %v596 = vadd.f32 %v496, %v564
    %v597 = vadd.f32 %v497, %v565
    %v598 = vadd.f32 %v498, %v566
    %v599 = vadd.f32 %v499, %v567
    %v600 = vadd.f32 %v500, %v568
    %v601 = vadd.f32 %v501, %v569
    %v602 = vadd.f32 %v502, %v570
    %v603 = vadd.f32 %v503, %v571
    %v604 = vld [vmem:[%s2 + $0x4] sm:$0xf]
    %v606 = vlaneseq
    %v607 = vshrl.u32 %v606, 7
    %v608 = vsub.s32 0, %v607
    %v609 = vrot.slane %v604, %v608
    %v610 = vlaneseq
    %v611 = vshrl.u32 %v610, 7
    %v612 = vsub.s32 1, %v611
    %v613 = vrot.slane %v604, %v612
    %v614 = vlaneseq
    %v615 = vshrl.u32 %v614, 7
    %v616 = vsub.s32 2, %v615
    %v617 = vrot.slane %v604, %v616
    %v618 = vlaneseq
    %v619 = vshrl.u32 %v618, 7
    %v620 = vsub.s32 3, %v619
    %v621 = vrot.slane %v604, %v620
    %v626 = vadd.f32 %v572, %v609
    %v627 = vadd.f32 %v573, %v613
    %v628 = vadd.f32 %v574, %v617
    %v629 = vadd.f32 %v575, %v621
    %v630 = vadd.f32 %v576, %v609
    %v631 = vadd.f32 %v577, %v613
    %v632 = vadd.f32 %v578, %v617
    %v633 = vadd.f32 %v579, %v621
    %v634 = vadd.f32 %v580, %v609
    %v635 = vadd.f32 %v581, %v613
    %v636 = vadd.f32 %v582, %v617
    %v637 = vadd.f32 %v583, %v621
    %v638 = vadd.f32 %v584, %v609
    %v639 = vadd.f32 %v585, %v613
    %v640 = vadd.f32 %v586, %v617
    %v641 = vadd.f32 %v587, %v621
    %v642 = vadd.f32 %v588, %v609
    %v643 = vadd.f32 %v589, %v613
    %v644 = vadd.f32 %v590, %v617
    %v645 = vadd.f32 %v591, %v621
    %v646 = vadd.f32 %v592, %v609
    %v647 = vadd.f32 %v593, %v613
    %v648 = vadd.f32 %v594, %v617
    %v649 = vadd.f32 %v595, %v621
    %v650 = vadd.f32 %v596, %v609
    %v651 = vadd.f32 %v597, %v613
    %v652 = vadd.f32 %v598, %v617
    %v653 = vadd.f32 %v599, %v621
    %v654 = vadd.f32 %v600, %v609
    %v655 = vadd.f32 %v601, %v613
    %v656 = vadd.f32 %v602, %v617
    %v657 = vadd.f32 %v603, %v621
    %v658 = vmax.f32 %v626, 0.0
    %v659 = vmax.f32 %v627, 0.0
    %v660 = vmax.f32 %v628, 0.0
    %v661 = vmax.f32 %v629, 0.0
    %v662 = vmax.f32 %v630, 0.0
    %v663 = vmax.f32 %v631, 0.0
    %v664 = vmax.f32 %v632, 0.0
    %v665 = vmax.f32 %v633, 0.0
    %v666 = vmax.f32 %v634, 0.0
    %v667 = vmax.f32 %v635, 0.0
    %v668 = vmax.f32 %v636, 0.0
    %v669 = vmax.f32 %v637, 0.0
    %v670 = vmax.f32 %v638, 0.0
    %v671 = vmax.f32 %v639, 0.0
    %v672 = vmax.f32 %v640, 0.0
    %v673 = vmax.f32 %v641, 0.0
    %v674 = vmax.f32 %v642, 0.0
    %v675 = vmax.f32 %v643, 0.0
    %v676 = vmax.f32 %v644, 0.0
    %v677 = vmax.f32 %v645, 0.0
    %v678 = vmax.f32 %v646, 0.0
    %v679 = vmax.f32 %v647, 0.0
    %v680 = vmax.f32 %v648, 0.0
    %v681 = vmax.f32 %v649, 0.0
    %v682 = vmax.f32 %v650, 0.0
    %v683 = vmax.f32 %v651, 0.0
    %v684 = vmax.f32 %v652, 0.0
    %v685 = vmax.f32 %v653, 0.0
    %v686 = vmax.f32 %v654, 0.0
    %v687 = vmax.f32 %v655, 0.0
    %v688 = vmax.f32 %v656, 0.0
    %v689 = vmax.f32 %v657, 0.0
    %v690 = vld [vmem:[#allocation2 + $0x200] sm:$0xff]
    %v691 = vld [vmem:[#allocation2 + $0x208] sm:$0xff]
    %v692 = vld [vmem:[#allocation2 + $0x210] sm:$0xff]
    %v693 = vld [vmem:[#allocation2 + $0x218] sm:$0xff]
    %v694 = vld [vmem:[#allocation2 + $0x220] sm:$0xff]
    %v695 = vld [vmem:[#allocation2 + $0x228] sm:$0xff]
    %v696 = vld [vmem:[#allocation2 + $0x230] sm:$0xff]
    %v697 = vld [vmem:[#allocation2 + $0x238] sm:$0xff]
    %v698 = vld [vmem:[#allocation2 + $0x240] sm:$0xff]
    %v699 = vld [vmem:[#allocation2 + $0x248] sm:$0xff]
    %v700 = vld [vmem:[#allocation2 + $0x250] sm:$0xff]
    %v701 = vld [vmem:[#allocation2 + $0x258] sm:$0xff]
    %v702 = vld [vmem:[#allocation2 + $0x260] sm:$0xff]
    %v703 = vld [vmem:[#allocation2 + $0x268] sm:$0xff]
    %v704 = vld [vmem:[#allocation2 + $0x270] sm:$0xff]
    %v705 = vld [vmem:[#allocation2 + $0x278] sm:$0xff]
    %v706 = vld [vmem:[#allocation2 + $0x280] sm:$0xff]
    %v707 = vld [vmem:[#allocation2 + $0x288] sm:$0xff]
    %v708 = vld [vmem:[#allocation2 + $0x290] sm:$0xff]
    %v709 = vld [vmem:[#allocation2 + $0x298] sm:$0xff]
    %v710 = vld [vmem:[#allocation2 + $0x2a0] sm:$0xff]
    %v711 = vld [vmem:[#allocation2 + $0x2a8] sm:$0xff]
    %v712 = vld [vmem:[#allocation2 + $0x2b0] sm:$0xff]
    %v713 = vld [vmem:[#allocation2 + $0x2b8] sm:$0xff]
    %v714 = vld [vmem:[#allocation2 + $0x2c0] sm:$0xff]
    %v715 = vld [vmem:[#allocation2 + $0x2c8] sm:$0xff]
    %v716 = vld [vmem:[#allocation2 + $0x2d0] sm:$0xff]
    %v717 = vld [vmem:[#allocation2 + $0x2d8] sm:$0xff]
    %v718 = vld [vmem:[#allocation2 + $0x2e0] sm:$0xff]
    %v719 = vld [vmem:[#allocation2 + $0x2e8] sm:$0xff]
    %v720 = vld [vmem:[#allocation2 + $0x2f0] sm:$0xff]
    %v721 = vld [vmem:[#allocation2 + $0x2f8] sm:$0xff]
    %v722 = vld [vmem:[#allocation2 + $0x300] sm:$0xff]
    %v723 = vld [vmem:[#allocation2 + $0x308] sm:$0xff]
    %v724 = vld [vmem:[#allocation2 + $0x310] sm:$0xff]
    %v725 = vld [vmem:[#allocation2 + $0x318] sm:$0xff]
    %v726 = vld [vmem:[#allocation2 + $0x320] sm:$0xff]
    %v727 = vld [vmem:[#allocation2 + $0x328] sm:$0xff]
    %v728 = vld [vmem:[#allocation2 + $0x330] sm:$0xff]
    %v729 = vld [vmem:[#allocation2 + $0x338] sm:$0xff]
    %v730 = vld [vmem:[#allocation2 + $0x340] sm:$0xff]
    %v731 = vld [vmem:[#allocation2 + $0x348] sm:$0xff]
    %v732 = vld [vmem:[#allocation2 + $0x350] sm:$0xff]
    %v733 = vld [vmem:[#allocation2 + $0x358] sm:$0xff]
    %v734 = vld [vmem:[#allocation2 + $0x360] sm:$0xff]
    %v735 = vld [vmem:[#allocation2 + $0x368] sm:$0xff]
    %v736 = vld [vmem:[#allocation2 + $0x370] sm:$0xff]
    %v737 = vld [vmem:[#allocation2 + $0x378] sm:$0xff]
    %v738 = vld [vmem:[#allocation2 + $0x380] sm:$0xff]
    %v739 = vld [vmem:[#allocation2 + $0x388] sm:$0xff]
    %v740 = vld [vmem:[#allocation2 + $0x390] sm:$0xff]
    %v741 = vld [vmem:[#allocation2 + $0x398] sm:$0xff]
    %v742 = vld [vmem:[#allocation2 + $0x3a0] sm:$0xff]
    %v743 = vld [vmem:[#allocation2 + $0x3a8] sm:$0xff]
    %v744 = vld [vmem:[#allocation2 + $0x3b0] sm:$0xff]
    %v745 = vld [vmem:[#allocation2 + $0x3b8] sm:$0xff]
    %v746 = vld [vmem:[#allocation2 + $0x3c0] sm:$0xff]
    %v747 = vld [vmem:[#allocation2 + $0x3c8] sm:$0xff]
    %v748 = vld [vmem:[#allocation2 + $0x3d0] sm:$0xff]
    %v749 = vld [vmem:[#allocation2 + $0x3d8] sm:$0xff]
    %v750 = vld [vmem:[#allocation2 + $0x3e0] sm:$0xff]
    %v751 = vld [vmem:[#allocation2 + $0x3e8] sm:$0xff]
    %v752 = vld [vmem:[#allocation2 + $0x3f0] sm:$0xff]
    %v753 = vld [vmem:[#allocation2 + $0x3f8] sm:$0xff]
    %754 = vmatprep.subr.mxu0 0.0
    %755 = vmatpush1.msra.mxu0 %v705
    %756 = vmatprep.subr.mxu0 0.0
    %757 = vmatpush1.msra.mxu0 %v704
    %758 = vmatprep.subr.mxu0 0.0
    %759 = vmatpush1.msra.mxu0 %v703
    %760 = vmatprep.subr.mxu0 0.0
    %761 = vmatpush1.msra.mxu0 %v702
    %762 = vmatprep.subr.mxu0 0.0
    %763 = vmatpush1.msra.mxu0 %v701
    %764 = vmatprep.subr.mxu0 0.0
    %765 = vmatpush1.msra.mxu0 %v700
    %766 = vmatprep.subr.mxu0 0.0
    %767 = vmatpush1.msra.mxu0 %v699
    %768 = vmatprep.subr.mxu0 0.0
    %769 = vmatpush1.msra.mxu0 %v698
    %770 = vmatprep.subr.mxu0 0.0
    %771 = vmatpush1.msra.mxu0 %v697
    %772 = vmatprep.subr.mxu0 0.0
    %773 = vmatpush1.msra.mxu0 %v696
    %774 = vmatprep.subr.mxu0 0.0
    %775 = vmatpush1.msra.mxu0 %v695
    %776 = vmatprep.subr.mxu0 0.0
    %777 = vmatpush1.msra.mxu0 %v694
    %778 = vmatprep.subr.mxu0 0.0
    %779 = vmatpush1.msra.mxu0 %v693
    %780 = vmatprep.subr.mxu0 0.0
    %781 = vmatpush1.msra.mxu0 %v692
    %782 = vmatprep.subr.mxu0 0.0
    %783 = vmatpush1.msra.mxu0 %v691
    %784 = vmatprep.subr.mxu0 0.0
    %785 = vmatpush1.msra.mxu0 %v690
    %786 = vmatprep.subr.mxu0 0.0
    %787 = vmatpush2.msra.mxu0 %v721
    %788 = vmatprep.subr.mxu0 0.0
    %789 = vmatpush2.msra.mxu0 %v720
    %790 = vmatprep.subr.mxu0 0.0
    %791 = vmatpush2.msra.mxu0 %v719
    %792 = vmatprep.subr.mxu0 0.0
    %793 = vmatpush2.msra.mxu0 %v718
    %794 = vmatprep.subr.mxu0 0.0
    %795 = vmatpush2.msra.mxu0 %v717
    %796 = vmatprep.subr.mxu0 0.0
    %797 = vmatpush2.msra.mxu0 %v716
    %798 = vmatprep.subr.mxu0 0.0
    %799 = vmatpush2.msra.mxu0 %v715
    %800 = vmatprep.subr.mxu0 0.0
    %801 = vmatpush2.msra.mxu0 %v714
    %802 = vmatprep.subr.mxu0 0.0
    %803 = vmatpush2.msra.mxu0 %v713
    %804 = vmatprep.subr.mxu0 0.0
    %805 = vmatpush2.msra.mxu0 %v712
    %806 = vmatprep.subr.mxu0 0.0
    %807 = vmatpush2.msra.mxu0 %v711
    %808 = vmatprep.subr.mxu0 0.0
    %809 = vmatpush2.msra.mxu0 %v710
    %810 = vmatprep.subr.mxu0 0.0
    %811 = vmatpush2.msra.mxu0 %v709
    %812 = vmatprep.subr.mxu0 0.0
    %813 = vmatpush2.msra.mxu0 %v708
    %814 = vmatprep.subr.mxu0 0.0
    %815 = vmatpush2.msra.mxu0 %v707
    %816 = vmatprep.subr.mxu0 0.0
    %817 = vmatpush2.msra.mxu0 %v706
    %818 = vmatprep.mubr.f32.mxu0 %v659
    %819 = vmatmul.mubr.f32.gmra.mxu0 %v658
    %v820 = vpop.f32.mrf.mxu0
    %v821 = vadd.f32 0.0, %v820
    %v822 = vpop.f32.mrf.mxu0
    %823 = vmatprep.mubr.f32.mxu0 %v663
    %824 = vmatmul.mubr.f32.gmra.mxu0 %v662
    %v825 = vpop.f32.mrf.mxu0
    %v826 = vadd.f32 0.0, %v825
    %v827 = vpop.f32.mrf.mxu0
    %828 = vmatprep.mubr.f32.mxu0 %v667
    %829 = vmatmul.mubr.f32.gmra.mxu0 %v666
    %v830 = vpop.f32.mrf.mxu0
    %v831 = vadd.f32 0.0, %v830
    %v832 = vpop.f32.mrf.mxu0
    %833 = vmatprep.mubr.f32.mxu0 %v671
    %834 = vmatmul.mubr.f32.gmra.mxu0 %v670
    %v835 = vpop.f32.mrf.mxu0
    %v836 = vadd.f32 0.0, %v835
    %v837 = vpop.f32.mrf.mxu0
    %838 = vmatprep.mubr.f32.mxu0 %v675
    %839 = vmatmul.mubr.f32.gmra.mxu0 %v674
    %v840 = vpop.f32.mrf.mxu0
    %v841 = vadd.f32 0.0, %v840
    %v842 = vpop.f32.mrf.mxu0
    %843 = vmatprep.mubr.f32.mxu0 %v679
    %844 = vmatmul.mubr.f32.gmra.mxu0 %v678
    %v845 = vpop.f32.mrf.mxu0
    %v846 = vadd.f32 0.0, %v845
    %v847 = vpop.f32.mrf.mxu0
    %848 = vmatprep.mubr.f32.mxu0 %v683
    %849 = vmatmul.mubr.f32.gmra.mxu0 %v682
    %v850 = vpop.f32.mrf.mxu0
    %v851 = vadd.f32 0.0, %v850
    %v852 = vpop.f32.mrf.mxu0
    %853 = vmatprep.mubr.f32.mxu0 %v687
    %854 = vmatmul.mubr.f32.gmra.mxu0 %v686
    %v855 = vpop.f32.mrf.mxu0
    %v856 = vadd.f32 0.0, %v855
    %v857 = vpop.f32.mrf.mxu0
    %858 = vdwg.mxu0
    %859 = vmatprep.subr.mxu0 0.0
    %860 = vmatpush1.msra.mxu0 %v737
    %861 = vmatprep.subr.mxu0 0.0
    %862 = vmatpush1.msra.mxu0 %v736
    %863 = vmatprep.subr.mxu0 0.0
    %864 = vmatpush1.msra.mxu0 %v735
    %865 = vmatprep.subr.mxu0 0.0
    %866 = vmatpush1.msra.mxu0 %v734
    %867 = vmatprep.subr.mxu0 0.0
    %868 = vmatpush1.msra.mxu0 %v733
    %869 = vmatprep.subr.mxu0 0.0
    %870 = vmatpush1.msra.mxu0 %v732
    %871 = vmatprep.subr.mxu0 0.0
    %872 = vmatpush1.msra.mxu0 %v731
    %873 = vmatprep.subr.mxu0 0.0
    %874 = vmatpush1.msra.mxu0 %v730
    %875 = vmatprep.subr.mxu0 0.0
    %876 = vmatpush1.msra.mxu0 %v729
    %877 = vmatprep.subr.mxu0 0.0
    %878 = vmatpush1.msra.mxu0 %v728
    %879 = vmatprep.subr.mxu0 0.0
    %880 = vmatpush1.msra.mxu0 %v727
    %881 = vmatprep.subr.mxu0 0.0
    %882 = vmatpush1.msra.mxu0 %v726
    %883 = vmatprep.subr.mxu0 0.0
    %884 = vmatpush1.msra.mxu0 %v725
    %885 = vmatprep.subr.mxu0 0.0
    %886 = vmatpush1.msra.mxu0 %v724
    %887 = vmatprep.subr.mxu0 0.0
    %888 = vmatpush1.msra.mxu0 %v723
    %889 = vmatprep.subr.mxu0 0.0
    %890 = vmatpush1.msra.mxu0 %v722
    %891 = vmatprep.subr.mxu0 0.0
    %892 = vmatpush2.msra.mxu0 %v753
    %893 = vmatprep.subr.mxu0 0.0
    %894 = vmatpush2.msra.mxu0 %v752
    %895 = vmatprep.subr.mxu0 0.0
    %896 = vmatpush2.msra.mxu0 %v751
    %897 = vmatprep.subr.mxu0 0.0
    %898 = vmatpush2.msra.mxu0 %v750
    %899 = vmatprep.subr.mxu0 0.0
    %900 = vmatpush2.msra.mxu0 %v749
    %901 = vmatprep.subr.mxu0 0.0
    %902 = vmatpush2.msra.mxu0 %v748
    %903 = vmatprep.subr.mxu0 0.0
    %904 = vmatpush2.msra.mxu0 %v747
    %905 = vmatprep.subr.mxu0 0.0
    %906 = vmatpush2.msra.mxu0 %v746
    %907 = vmatprep.subr.mxu0 0.0
    %908 = vmatpush2.msra.mxu0 %v745
    %909 = vmatprep.subr.mxu0 0.0
    %910 = vmatpush2.msra.mxu0 %v744
    %911 = vmatprep.subr.mxu0 0.0
    %912 = vmatpush2.msra.mxu0 %v743
    %913 = vmatprep.subr.mxu0 0.0
    %914 = vmatpush2.msra.mxu0 %v742
    %915 = vmatprep.subr.mxu0 0.0
    %916 = vmatpush2.msra.mxu0 %v741
    %917 = vmatprep.subr.mxu0 0.0
    %918 = vmatpush2.msra.mxu0 %v740
    %919 = vmatprep.subr.mxu0 0.0
    %920 = vmatpush2.msra.mxu0 %v739
    %921 = vmatprep.subr.mxu0 0.0
    %922 = vmatpush2.msra.mxu0 %v738
    %923 = vmatprep.mubr.f32.mxu0 %v661
    %924 = vmatmul.mubr.f32.gmra.mxu0 %v660
    %v925 = vpop.f32.mrf.mxu0
    %v926 = vadd.f32 %v821, %v925
    %v927 = vpop.f32.mrf.mxu0
    %928 = vmatprep.mubr.f32.mxu0 %v665
    %929 = vmatmul.mubr.f32.gmra.mxu0 %v664
    %v930 = vpop.f32.mrf.mxu0
    %v931 = vadd.f32 %v826, %v930
    %v932 = vpop.f32.mrf.mxu0
    %933 = vmatprep.mubr.f32.mxu0 %v669
    %934 = vmatmul.mubr.f32.gmra.mxu0 %v668
    %v935 = vpop.f32.mrf.mxu0
    %v936 = vadd.f32 %v831, %v935
    %v937 = vpop.f32.mrf.mxu0
    %938 = vmatprep.mubr.f32.mxu0 %v673
    %939 = vmatmul.mubr.f32.gmra.mxu0 %v672
    %v940 = vpop.f32.mrf.mxu0
    %v941 = vadd.f32 %v836, %v940
    %v942 = vpop.f32.mrf.mxu0
    %943 = vmatprep.mubr.f32.mxu0 %v677
    %944 = vmatmul.mubr.f32.gmra.mxu0 %v676
    %v945 = vpop.f32.mrf.mxu0
    %v946 = vadd.f32 %v841, %v945
    %v947 = vpop.f32.mrf.mxu0
    %948 = vmatprep.mubr.f32.mxu0 %v681
    %949 = vmatmul.mubr.f32.gmra.mxu0 %v680
    %v950 = vpop.f32.mrf.mxu0
    %v951 = vadd.f32 %v846, %v950
    %v952 = vpop.f32.mrf.mxu0
    %953 = vmatprep.mubr.f32.mxu0 %v685
    %954 = vmatmul.mubr.f32.gmra.mxu0 %v684
    %v955 = vpop.f32.mrf.mxu0
    %v956 = vadd.f32 %v851, %v955
    %v957 = vpop.f32.mrf.mxu0
    %958 = vmatprep.mubr.f32.mxu0 %v689
    %959 = vmatmul.mubr.f32.gmra.mxu0 %v688
    %v960 = vpop.f32.mrf.mxu0
    %v961 = vadd.f32 %v856, %v960
    %v962 = vpop.f32.mrf.mxu0
    %963 = vdwg.mxu0
    %964 = vmatprep.subr.mxu0 0.0
    %965 = vmatpush1.msra.mxu0 %v385
    %966 = vmatprep.subr.mxu0 0.0
    %967 = vmatpush1.msra.mxu0 %v384
    %968 = vmatprep.subr.mxu0 0.0
    %969 = vmatpush1.msra.mxu0 %v383
    %970 = vmatprep.subr.mxu0 0.0
    %971 = vmatpush1.msra.mxu0 %v382
    %972 = vmatprep.subr.mxu0 0.0
    %973 = vmatpush1.msra.mxu0 %v381
    %974 = vmatprep.subr.mxu0 0.0
    %975 = vmatpush1.msra.mxu0 %v380
    %976 = vmatprep.subr.mxu0 0.0
    %977 = vmatpush1.msra.mxu0 %v379
    %978 = vmatprep.subr.mxu0 0.0
    %979 = vmatpush1.msra.mxu0 %v378
    %980 = vmatprep.subr.mxu0 0.0
    %981 = vmatpush1.msra.mxu0 %v377
    %982 = vmatprep.subr.mxu0 0.0
    %983 = vmatpush1.msra.mxu0 %v376
    %984 = vmatprep.subr.mxu0 0.0
    %985 = vmatpush1.msra.mxu0 %v375
    %986 = vmatprep.subr.mxu0 0.0
    %987 = vmatpush1.msra.mxu0 %v374
    %988 = vmatprep.subr.mxu0 0.0
    %989 = vmatpush1.msra.mxu0 %v373
    %990 = vmatprep.subr.mxu0 0.0
    %991 = vmatpush1.msra.mxu0 %v372
    %992 = vmatprep.subr.mxu0 0.0
    %993 = vmatpush1.msra.mxu0 %v371
    %994 = vmatprep.subr.mxu0 0.0
    %995 = vmatpush1.msra.mxu0 %v370
    %996 = vmatprep.subr.mxu0 0.0
    %997 = vmatpush2.msra.mxu0 %v401
    %998 = vmatprep.subr.mxu0 0.0
    %999 = vmatpush2.msra.mxu0 %v400
    %1000 = vmatprep.subr.mxu0 0.0
    %1001 = vmatpush2.msra.mxu0 %v399
    %1002 = vmatprep.subr.mxu0 0.0
    %1003 = vmatpush2.msra.mxu0 %v398
    %1004 = vmatprep.subr.mxu0 0.0
    %1005 = vmatpush2.msra.mxu0 %v397
    %1006 = vmatprep.subr.mxu0 0.0
    %1007 = vmatpush2.msra.mxu0 %v396
    %1008 = vmatprep.subr.mxu0 0.0
    %1009 = vmatpush2.msra.mxu0 %v395
    %1010 = vmatprep.subr.mxu0 0.0
    %1011 = vmatpush2.msra.mxu0 %v394
    %1012 = vmatprep.subr.mxu0 0.0
    %1013 = vmatpush2.msra.mxu0 %v393
    %1014 = vmatprep.subr.mxu0 0.0
    %1015 = vmatpush2.msra.mxu0 %v392
    %1016 = vmatprep.subr.mxu0 0.0
    %1017 = vmatpush2.msra.mxu0 %v391
    %1018 = vmatprep.subr.mxu0 0.0
    %1019 = vmatpush2.msra.mxu0 %v390
    %1020 = vmatprep.subr.mxu0 0.0
    %1021 = vmatpush2.msra.mxu0 %v389
    %1022 = vmatprep.subr.mxu0 0.0
    %1023 = vmatpush2.msra.mxu0 %v388
    %1024 = vmatprep.subr.mxu0 0.0
    %1025 = vmatpush2.msra.mxu0 %v387
    %1026 = vmatprep.subr.mxu0 0.0
    %1027 = vmatpush2.msra.mxu0 %v386
    %1028 = vmatprep.mubr.f32.mxu0 %v339
    %1029 = vmatmul.mubr.f32.gmra.mxu0 %v338
    %v1030 = vpop.f32.mrf.mxu0
    %v1031 = vadd.f32 %v926, %v1030
    %v1032 = vpop.f32.mrf.mxu0
    %1033 = vmatprep.mubr.f32.mxu0 %v343
    %1034 = vmatmul.mubr.f32.gmra.mxu0 %v342
    %v1035 = vpop.f32.mrf.mxu0
    %v1036 = vadd.f32 %v931, %v1035
    %v1037 = vpop.f32.mrf.mxu0
    %1038 = vmatprep.mubr.f32.mxu0 %v347
    %1039 = vmatmul.mubr.f32.gmra.mxu0 %v346
    %v1040 = vpop.f32.mrf.mxu0
    %v1041 = vadd.f32 %v936, %v1040
    %v1042 = vpop.f32.mrf.mxu0
    %1043 = vmatprep.mubr.f32.mxu0 %v351
    %1044 = vmatmul.mubr.f32.gmra.mxu0 %v350
    %v1045 = vpop.f32.mrf.mxu0
    %v1046 = vadd.f32 %v941, %v1045
    %v1047 = vpop.f32.mrf.mxu0
    %1048 = vmatprep.mubr.f32.mxu0 %v355
    %1049 = vmatmul.mubr.f32.gmra.mxu0 %v354
    %v1050 = vpop.f32.mrf.mxu0
    %v1051 = vadd.f32 %v946, %v1050
    %v1052 = vpop.f32.mrf.mxu0
    %1053 = vmatprep.mubr.f32.mxu0 %v359
    %1054 = vmatmul.mubr.f32.gmra.mxu0 %v358
    %v1055 = vpop.f32.mrf.mxu0
    %v1056 = vadd.f32 %v951, %v1055
    %v1057 = vpop.f32.mrf.mxu0
    %1058 = vmatprep.mubr.f32.mxu0 %v363
    %1059 = vmatmul.mubr.f32.gmra.mxu0 %v362
    %v1060 = vpop.f32.mrf.mxu0
    %v1061 = vadd.f32 %v956, %v1060
    %v1062 = vpop.f32.mrf.mxu0
    %1063 = vmatprep.mubr.f32.mxu0 %v367
    %1064 = vmatmul.mubr.f32.gmra.mxu0 %v366
    %v1065 = vpop.f32.mrf.mxu0
    %v1066 = vadd.f32 %v961, %v1065
    %v1067 = vpop.f32.mrf.mxu0
    %1068 = vdwg.mxu0
    %1069 = vmatprep.subr.mxu0 0.0
    %1070 = vmatpush1.msra.mxu0 %v417
    %1071 = vmatprep.subr.mxu0 0.0
    %1072 = vmatpush1.msra.mxu0 %v416
    %1073 = vmatprep.subr.mxu0 0.0
    %1074 = vmatpush1.msra.mxu0 %v415
    %1075 = vmatprep.subr.mxu0 0.0
    %1076 = vmatpush1.msra.mxu0 %v414
    %1077 = vmatprep.subr.mxu0 0.0
    %1078 = vmatpush1.msra.mxu0 %v413
    %1079 = vmatprep.subr.mxu0 0.0
    %1080 = vmatpush1.msra.mxu0 %v412
    %1081 = vmatprep.subr.mxu0 0.0
    %1082 = vmatpush1.msra.mxu0 %v411
    %1083 = vmatprep.subr.mxu0 0.0
    %1084 = vmatpush1.msra.mxu0 %v410
    %1085 = vmatprep.subr.mxu0 0.0
    %1086 = vmatpush1.msra.mxu0 %v409
    %1087 = vmatprep.subr.mxu0 0.0
    %1088 = vmatpush1.msra.mxu0 %v408
    %1089 = vmatprep.subr.mxu0 0.0
    %1090 = vmatpush1.msra.mxu0 %v407
    %1091 = vmatprep.subr.mxu0 0.0
    %1092 = vmatpush1.msra.mxu0 %v406
    %1093 = vmatprep.subr.mxu0 0.0
    %1094 = vmatpush1.msra.mxu0 %v405
    %1095 = vmatprep.subr.mxu0 0.0
    %1096 = vmatpush1.msra.mxu0 %v404
    %1097 = vmatprep.subr.mxu0 0.0
    %1098 = vmatpush1.msra.mxu0 %v403
    %1099 = vmatprep.subr.mxu0 0.0
    %1100 = vmatpush1.msra.mxu0 %v402
    %1101 = vmatprep.subr.mxu0 0.0
    %1102 = vmatpush2.msra.mxu0 %v433
    %1103 = vmatprep.subr.mxu0 0.0
    %1104 = vmatpush2.msra.mxu0 %v432
    %1105 = vmatprep.subr.mxu0 0.0
    %1106 = vmatpush2.msra.mxu0 %v431
    %1107 = vmatprep.subr.mxu0 0.0
    %1108 = vmatpush2.msra.mxu0 %v430
    %1109 = vmatprep.subr.mxu0 0.0
    %1110 = vmatpush2.msra.mxu0 %v429
    %1111 = vmatprep.subr.mxu0 0.0
    %1112 = vmatpush2.msra.mxu0 %v428
    %1113 = vmatprep.subr.mxu0 0.0
    %1114 = vmatpush2.msra.mxu0 %v427
    %1115 = vmatprep.subr.mxu0 0.0
    %1116 = vmatpush2.msra.mxu0 %v426
    %1117 = vmatprep.subr.mxu0 0.0
    %1118 = vmatpush2.msra.mxu0 %v425
    %1119 = vmatprep.subr.mxu0 0.0
    %1120 = vmatpush2.msra.mxu0 %v424
    %1121 = vmatprep.subr.mxu0 0.0
    %1122 = vmatpush2.msra.mxu0 %v423
    %1123 = vmatprep.subr.mxu0 0.0
    %1124 = vmatpush2.msra.mxu0 %v422
    %1125 = vmatprep.subr.mxu0 0.0
    %1126 = vmatpush2.msra.mxu0 %v421
    %1127 = vmatprep.subr.mxu0 0.0
    %1128 = vmatpush2.msra.mxu0 %v420
    %1129 = vmatprep.subr.mxu0 0.0
    %1130 = vmatpush2.msra.mxu0 %v419
    %1131 = vmatprep.subr.mxu0 0.0
    %1132 = vmatpush2.msra.mxu0 %v418
    %1133 = vmatprep.mubr.f32.mxu0 %v341
    %1134 = vmatmul.mubr.f32.gmra.mxu0 %v340
    %v1135 = vpop.f32.mrf.mxu0
    %v1136 = vadd.f32 %v1031, %v1135
    %v1137 = vpop.f32.mrf.mxu0
    %1138 = vmatprep.mubr.f32.mxu0 %v345
    %1139 = vmatmul.mubr.f32.gmra.mxu0 %v344
    %v1140 = vpop.f32.mrf.mxu0
    %v1141 = vadd.f32 %v1036, %v1140
    %v1142 = vpop.f32.mrf.mxu0
    %1143 = vmatprep.mubr.f32.mxu0 %v349
    %1144 = vmatmul.mubr.f32.gmra.mxu0 %v348
    %v1145 = vpop.f32.mrf.mxu0
    %v1146 = vadd.f32 %v1041, %v1145
    %v1147 = vpop.f32.mrf.mxu0
    %1148 = vmatprep.mubr.f32.mxu0 %v353
    %1149 = vmatmul.mubr.f32.gmra.mxu0 %v352
    %v1150 = vpop.f32.mrf.mxu0
    %v1151 = vadd.f32 %v1046, %v1150
    %v1152 = vpop.f32.mrf.mxu0
    %1153 = vmatprep.mubr.f32.mxu0 %v357
    %1154 = vmatmul.mubr.f32.gmra.mxu0 %v356
    %v1155 = vpop.f32.mrf.mxu0
    %v1156 = vadd.f32 %v1051, %v1155
    %v1157 = vpop.f32.mrf.mxu0
    %1158 = vmatprep.mubr.f32.mxu0 %v361
    %1159 = vmatmul.mubr.f32.gmra.mxu0 %v360
    %v1160 = vpop.f32.mrf.mxu0
    %v1161 = vadd.f32 %v1056, %v1160
    %v1162 = vpop.f32.mrf.mxu0
    %1163 = vmatprep.mubr.f32.mxu0 %v365
    %1164 = vmatmul.mubr.f32.gmra.mxu0 %v364
    %v1165 = vpop.f32.mrf.mxu0
    %v1166 = vadd.f32 %v1061, %v1165
    %v1167 = vpop.f32.mrf.mxu0
    %1168 = vmatprep.mubr.f32.mxu0 %v369
    %1169 = vmatmul.mubr.f32.gmra.mxu0 %v368
    %v1170 = vpop.f32.mrf.mxu0
    %v1171 = vadd.f32 %v1066, %v1170
    %v1172 = vpop.f32.mrf.mxu0
    %1173 = vdwg.mxu0
    %v1174 = vld [vmem:[%s1 + $0x10] sm:$0xff]
    %v1176 = vlaneseq
    %v1177 = vshrl.u32 %v1176, 7
    %v1178 = vsub.s32 0, %v1177
    %v1179 = vrot.slane %v1174, %v1178
    %v1180 = vlaneseq
    %v1181 = vshrl.u32 %v1180, 7
    %v1182 = vsub.s32 2, %v1181
    %v1183 = vrot.slane %v1174, %v1182
    %v1184 = vlaneseq
    %v1185 = vshrl.u32 %v1184, 7
    %v1186 = vsub.s32 4, %v1185
    %v1187 = vrot.slane %v1174, %v1186
    %v1188 = vlaneseq
    %v1189 = vshrl.u32 %v1188, 7
    %v1190 = vsub.s32 6, %v1189
    %v1191 = vrot.slane %v1174, %v1190
    %v1196 = vlaneseq
    %v1197 = vshrl.u32 %v1196, 7
    %v1198 = vsub.s32 0, %v1197
    %v1199 = vrot.slane %v1179, %v1198
    %v1200 = vlaneseq
    %v1201 = vshrl.u32 %v1200, 7
    %v1202 = vsub.s32 0, %v1201
    %v1203 = vrot.slane %v1183, %v1202
    %v1204 = vlaneseq
    %v1205 = vshrl.u32 %v1204, 7
    %v1206 = vsub.s32 0, %v1205
    %v1207 = vrot.slane %v1187, %v1206
    %v1208 = vlaneseq
    %v1209 = vshrl.u32 %v1208, 7
    %v1210 = vsub.s32 0, %v1209
    %v1211 = vrot.slane %v1191, %v1210
    %v1212 = vmul.f32 %v45, %v1199
    %v1213 = vmul.f32 %v45, %v1203
    %v1214 = vmul.f32 %v45, %v1207
    %v1215 = vmul.f32 %v45, %v1211
    %v1216 = vmul.f32 %v50, %v1199
    %v1217 = vmul.f32 %v50, %v1203
    %v1218 = vmul.f32 %v50, %v1207
    %v1219 = vmul.f32 %v50, %v1211
    %v1220 = vmul.f32 %v55, %v1199
    %v1221 = vmul.f32 %v55, %v1203
    %v1222 = vmul.f32 %v55, %v1207
    %v1223 = vmul.f32 %v55, %v1211
    %v1224 = vmul.f32 %v60, %v1199
    %v1225 = vmul.f32 %v60, %v1203
    %v1226 = vmul.f32 %v60, %v1207
    %v1227 = vmul.f32 %v60, %v1211
    %v1228 = vmul.f32 %v65, %v1199
    %v1229 = vmul.f32 %v65, %v1203
    %v1230 = vmul.f32 %v65, %v1207
    %v1231 = vmul.f32 %v65, %v1211
    %v1232 = vmul.f32 %v70, %v1199
    %v1233 = vmul.f32 %v70, %v1203
    %v1234 = vmul.f32 %v70, %v1207
    %v1235 = vmul.f32 %v70, %v1211
    %v1236 = vmul.f32 %v75, %v1199
    %v1237 = vmul.f32 %v75, %v1203
    %v1238 = vmul.f32 %v75, %v1207
    %v1239 = vmul.f32 %v75, %v1211
    %v1240 = vmul.f32 %v80, %v1199
    %v1241 = vmul.f32 %v80, %v1203
    %v1242 = vmul.f32 %v80, %v1207
    %v1243 = vmul.f32 %v80, %v1211
    %v1244 = vlaneseq
    %v1245 = vshrl.u32 %v1244, 7
    %v1246 = vsub.s32 1, %v1245
    %v1247 = vrot.slane %v1174, %v1246
    %v1248 = vlaneseq
    %v1249 = vshrl.u32 %v1248, 7
    %v1250 = vsub.s32 3, %v1249
    %v1251 = vrot.slane %v1174, %v1250
    %v1252 = vlaneseq
    %v1253 = vshrl.u32 %v1252, 7
    %v1254 = vsub.s32 5, %v1253
    %v1255 = vrot.slane %v1174, %v1254
    %v1256 = vlaneseq
    %v1257 = vshrl.u32 %v1256, 7
    %v1258 = vsub.s32 7, %v1257
    %v1259 = vrot.slane %v1174, %v1258
    %v1264 = vlaneseq
    %v1265 = vshrl.u32 %v1264, 7
    %v1266 = vsub.s32 1, %v1265
    %v1267 = vrot.slane %v1247, %v1266
    %v1268 = vlaneseq
    %v1269 = vshrl.u32 %v1268, 7
    %v1270 = vsub.s32 1, %v1269
    %v1271 = vrot.slane %v1251, %v1270
    %v1272 = vlaneseq
    %v1273 = vshrl.u32 %v1272, 7
    %v1274 = vsub.s32 1, %v1273
    %v1275 = vrot.slane %v1255, %v1274
    %v1276 = vlaneseq
    %v1277 = vshrl.u32 %v1276, 7
    %v1278 = vsub.s32 1, %v1277
    %v1279 = vrot.slane %v1259, %v1278
    %v1280 = vmul.f32 %v84, %v1267
    %v1281 = vmul.f32 %v84, %v1271
    %v1282 = vmul.f32 %v84, %v1275
    %v1283 = vmul.f32 %v84, %v1279
    %v1284 = vmul.f32 %v88, %v1267
    %v1285 = vmul.f32 %v88, %v1271
    %v1286 = vmul.f32 %v88, %v1275
    %v1287 = vmul.f32 %v88, %v1279
    %v1288 = vmul.f32 %v92, %v1267
    %v1289 = vmul.f32 %v92, %v1271
    %v1290 = vmul.f32 %v92, %v1275
    %v1291 = vmul.f32 %v92, %v1279
    %v1292 = vmul.f32 %v96, %v1267
    %v1293 = vmul.f32 %v96, %v1271
    %v1294 = vmul.f32 %v96, %v1275
    %v1295 = vmul.f32 %v96, %v1279
    %v1296 = vmul.f32 %v100, %v1267
    %v1297 = vmul.f32 %v100, %v1271
    %v1298 = vmul.f32 %v100, %v1275
    %v1299 = vmul.f32 %v100, %v1279
    %v1300 = vmul.f32 %v104, %v1267
    %v1301 = vmul.f32 %v104, %v1271
    %v1302 = vmul.f32 %v104, %v1275
    %v1303 = vmul.f32 %v104, %v1279
    %v1304 = vmul.f32 %v108, %v1267
    %v1305 = vmul.f32 %v108, %v1271
    %v1306 = vmul.f32 %v108, %v1275
    %v1307 = vmul.f32 %v108, %v1279
    %v1308 = vmul.f32 %v112, %v1267
    %v1309 = vmul.f32 %v112, %v1271
    %v1310 = vmul.f32 %v112, %v1275
    %v1311 = vmul.f32 %v112, %v1279
    %v1312 = vadd.f32 %v1212, %v1280
    %v1313 = vadd.f32 %v1213, %v1281
    %v1314 = vadd.f32 %v1214, %v1282
    %v1315 = vadd.f32 %v1215, %v1283
    %v1316 = vadd.f32 %v1216, %v1284
    %v1317 = vadd.f32 %v1217, %v1285
    %v1318 = vadd.f32 %v1218, %v1286
    %v1319 = vadd.f32 %v1219, %v1287
    %v1320 = vadd.f32 %v1220, %v1288
    %v1321 = vadd.f32 %v1221, %v1289
    %v1322 = vadd.f32 %v1222, %v1290
    %v1323 = vadd.f32 %v1223, %v1291
    %v1324 = vadd.f32 %v1224, %v1292
    %v1325 = vadd.f32 %v1225, %v1293
    %v1326 = vadd.f32 %v1226, %v1294
    %v1327 = vadd.f32 %v1227, %v1295
    %v1328 = vadd.f32 %v1228, %v1296
    %v1329 = vadd.f32 %v1229, %v1297
    %v1330 = vadd.f32 %v1230, %v1298
    %v1331 = vadd.f32 %v1231, %v1299
    %v1332 = vadd.f32 %v1232, %v1300
    %v1333 = vadd.f32 %v1233, %v1301
    %v1334 = vadd.f32 %v1234, %v1302
    %v1335 = vadd.f32 %v1235, %v1303
    %v1336 = vadd.f32 %v1236, %v1304
    %v1337 = vadd.f32 %v1237, %v1305
    %v1338 = vadd.f32 %v1238, %v1306
    %v1339 = vadd.f32 %v1239, %v1307
    %v1340 = vadd.f32 %v1240, %v1308
    %v1341 = vadd.f32 %v1241, %v1309
    %v1342 = vadd.f32 %v1242, %v1310
    %v1343 = vadd.f32 %v1243, %v1311
    %v1344 = vld [vmem:[%s2 + $0x8] sm:$0xf]
    %v1346 = vlaneseq
    %v1347 = vshrl.u32 %v1346, 7
    %v1348 = vsub.s32 0, %v1347
    %v1349 = vrot.slane %v1344, %v1348
    %v1350 = vlaneseq
    %v1351 = vshrl.u32 %v1350, 7
    %v1352 = vsub.s32 1, %v1351
    %v1353 = vrot.slane %v1344, %v1352
    %v1354 = vlaneseq
    %v1355 = vshrl.u32 %v1354, 7
    %v1356 = vsub.s32 2, %v1355
    %v1357 = vrot.slane %v1344, %v1356
    %v1358 = vlaneseq
    %v1359 = vshrl.u32 %v1358, 7
    %v1360 = vsub.s32 3, %v1359
    %v1361 = vrot.slane %v1344, %v1360
    %v1366 = vadd.f32 %v1312, %v1349
    %v1367 = vadd.f32 %v1313, %v1353
    %v1368 = vadd.f32 %v1314, %v1357
    %v1369 = vadd.f32 %v1315, %v1361
    %v1370 = vadd.f32 %v1316, %v1349
    %v1371 = vadd.f32 %v1317, %v1353
    %v1372 = vadd.f32 %v1318, %v1357
    %v1373 = vadd.f32 %v1319, %v1361
    %v1374 = vadd.f32 %v1320, %v1349
    %v1375 = vadd.f32 %v1321, %v1353
    %v1376 = vadd.f32 %v1322, %v1357
    %v1377 = vadd.f32 %v1323, %v1361
    %v1378 = vadd.f32 %v1324, %v1349
    %v1379 = vadd.f32 %v1325, %v1353
    %v1380 = vadd.f32 %v1326, %v1357
    %v1381 = vadd.f32 %v1327, %v1361
    %v1382 = vadd.f32 %v1328, %v1349
    %v1383 = vadd.f32 %v1329, %v1353
    %v1384 = vadd.f32 %v1330, %v1357
    %v1385 = vadd.f32 %v1331, %v1361
    %v1386 = vadd.f32 %v1332, %v1349
    %v1387 = vadd.f32 %v1333, %v1353
    %v1388 = vadd.f32 %v1334, %v1357
    %v1389 = vadd.f32 %v1335, %v1361
    %v1390 = vadd.f32 %v1336, %v1349
    %v1391 = vadd.f32 %v1337, %v1353
    %v1392 = vadd.f32 %v1338, %v1357
    %v1393 = vadd.f32 %v1339, %v1361
    %v1394 = vadd.f32 %v1340, %v1349
    %v1395 = vadd.f32 %v1341, %v1353
    %v1396 = vadd.f32 %v1342, %v1357
    %v1397 = vadd.f32 %v1343, %v1361
    %v1398 = vmax.f32 %v1366, 0.0
    %v1399 = vmax.f32 %v1367, 0.0
    %v1400 = vmax.f32 %v1368, 0.0
    %v1401 = vmax.f32 %v1369, 0.0
    %v1402 = vmax.f32 %v1370, 0.0
    %v1403 = vmax.f32 %v1371, 0.0
    %v1404 = vmax.f32 %v1372, 0.0
    %v1405 = vmax.f32 %v1373, 0.0
    %v1406 = vmax.f32 %v1374, 0.0
    %v1407 = vmax.f32 %v1375, 0.0
    %v1408 = vmax.f32 %v1376, 0.0
    %v1409 = vmax.f32 %v1377, 0.0
    %v1410 = vmax.f32 %v1378, 0.0
    %v1411 = vmax.f32 %v1379, 0.0
    %v1412 = vmax.f32 %v1380, 0.0
    %v1413 = vmax.f32 %v1381, 0.0
    %v1414 = vmax.f32 %v1382, 0.0
    %v1415 = vmax.f32 %v1383, 0.0
    %v1416 = vmax.f32 %v1384, 0.0
    %v1417 = vmax.f32 %v1385, 0.0
    %v1418 = vmax.f32 %v1386, 0.0
    %v1419 = vmax.f32 %v1387, 0.0
    %v1420 = vmax.f32 %v1388, 0.0
    %v1421 = vmax.f32 %v1389, 0.0
    %v1422 = vmax.f32 %v1390, 0.0
    %v1423 = vmax.f32 %v1391, 0.0
    %v1424 = vmax.f32 %v1392, 0.0
    %v1425 = vmax.f32 %v1393, 0.0
    %v1426 = vmax.f32 %v1394, 0.0
    %v1427 = vmax.f32 %v1395, 0.0
    %v1428 = vmax.f32 %v1396, 0.0
    %v1429 = vmax.f32 %v1397, 0.0
    %v1430 = vld [vmem:[#allocation2 + $0x400] sm:$0xff]
    %v1431 = vld [vmem:[#allocation2 + $0x408] sm:$0xff]
    %v1432 = vld [vmem:[#allocation2 + $0x410] sm:$0xff]
    %v1433 = vld [vmem:[#allocation2 + $0x418] sm:$0xff]
    %v1434 = vld [vmem:[#allocation2 + $0x420] sm:$0xff]
    %v1435 = vld [vmem:[#allocation2 + $0x428] sm:$0xff]
    %v1436 = vld [vmem:[#allocation2 + $0x430] sm:$0xff]
    %v1437 = vld [vmem:[#allocation2 + $0x438] sm:$0xff]
    %v1438 = vld [vmem:[#allocation2 + $0x440] sm:$0xff]
    %v1439 = vld [vmem:[#allocation2 + $0x448] sm:$0xff]
    %v1440 = vld [vmem:[#allocation2 + $0x450] sm:$0xff]
    %v1441 = vld [vmem:[#allocation2 + $0x458] sm:$0xff]
    %v1442 = vld [vmem:[#allocation2 + $0x460] sm:$0xff]
    %v1443 = vld [vmem:[#allocation2 + $0x468] sm:$0xff]
    %v1444 = vld [vmem:[#allocation2 + $0x470] sm:$0xff]
    %v1445 = vld [vmem:[#allocation2 + $0x478] sm:$0xff]
    %v1446 = vld [vmem:[#allocation2 + $0x480] sm:$0xff]
    %v1447 = vld [vmem:[#allocation2 + $0x488] sm:$0xff]
    %v1448 = vld [vmem:[#allocation2 + $0x490] sm:$0xff]
    %v1449 = vld [vmem:[#allocation2 + $0x498] sm:$0xff]
    %v1450 = vld [vmem:[#allocation2 + $0x4a0] sm:$0xff]
    %v1451 = vld [vmem:[#allocation2 + $0x4a8] sm:$0xff]
    %v1452 = vld [vmem:[#allocation2 + $0x4b0] sm:$0xff]
    %v1453 = vld [vmem:[#allocation2 + $0x4b8] sm:$0xff]
    %v1454 = vld [vmem:[#allocation2 + $0x4c0] sm:$0xff]
    %v1455 = vld [vmem:[#allocation2 + $0x4c8] sm:$0xff]
    %v1456 = vld [vmem:[#allocation2 + $0x4d0] sm:$0xff]
    %v1457 = vld [vmem:[#allocation2 + $0x4d8] sm:$0xff]
    %v1458 = vld [vmem:[#allocation2 + $0x4e0] sm:$0xff]
    %v1459 = vld [vmem:[#allocation2 + $0x4e8] sm:$0xff]
    %v1460 = vld [vmem:[#allocation2 + $0x4f0] sm:$0xff]
    %v1461 = vld [vmem:[#allocation2 + $0x4f8] sm:$0xff]
    %v1462 = vld [vmem:[#allocation2 + $0x500] sm:$0xff]
    %v1463 = vld [vmem:[#allocation2 + $0x508] sm:$0xff]
    %v1464 = vld [vmem:[#allocation2 + $0x510] sm:$0xff]
    %v1465 = vld [vmem:[#allocation2 + $0x518] sm:$0xff]
    %v1466 = vld [vmem:[#allocation2 + $0x520] sm:$0xff]
    %v1467 = vld [vmem:[#allocation2 + $0x528] sm:$0xff]
    %v1468 = vld [vmem:[#allocation2 + $0x530] sm:$0xff]
    %v1469 = vld [vmem:[#allocation2 + $0x538] sm:$0xff]
    %v1470 = vld [vmem:[#allocation2 + $0x540] sm:$0xff]
    %v1471 = vld [vmem:[#allocation2 + $0x548] sm:$0xff]
    %v1472 = vld [vmem:[#allocation2 + $0x550] sm:$0xff]
    %v1473 = vld [vmem:[#allocation2 + $0x558] sm:$0xff]
    %v1474 = vld [vmem:[#allocation2 + $0x560] sm:$0xff]
    %v1475 = vld [vmem:[#allocation2 + $0x568] sm:$0xff]
    %v1476 = vld [vmem:[#allocation2 + $0x570] sm:$0xff]
    %v1477 = vld [vmem:[#allocation2 + $0x578] sm:$0xff]
    %v1478 = vld [vmem:[#allocation2 + $0x580] sm:$0xff]
    %v1479 = vld [vmem:[#allocation2 + $0x588] sm:$0xff]
    %v1480 = vld [vmem:[#allocation2 + $0x590] sm:$0xff]
    %v1481 = vld [vmem:[#allocation2 + $0x598] sm:$0xff]
    %v1482 = vld [vmem:[#allocation2 + $0x5a0] sm:$0xff]
    %v1483 = vld [vmem:[#allocation2 + $0x5a8] sm:$0xff]
    %v1484 = vld [vmem:[#allocation2 + $0x5b0] sm:$0xff]
    %v1485 = vld [vmem:[#allocation2 + $0x5b8] sm:$0xff]
    %v1486 = vld [vmem:[#allocation2 + $0x5c0] sm:$0xff]
    %v1487 = vld [vmem:[#allocation2 + $0x5c8] sm:$0xff]
    %v1488 = vld [vmem:[#allocation2 + $0x5d0] sm:$0xff]
    %v1489 = vld [vmem:[#allocation2 + $0x5d8] sm:$0xff]
    %v1490 = vld [vmem:[#allocation2 + $0x5e0] sm:$0xff]
    %v1491 = vld [vmem:[#allocation2 + $0x5e8] sm:$0xff]
    %v1492 = vld [vmem:[#allocation2 + $0x5f0] sm:$0xff]
    %v1493 = vld [vmem:[#allocation2 + $0x5f8] sm:$0xff]
    %1494 = vmatprep.subr.mxu0 0.0
    %1495 = vmatpush1.msra.mxu0 %v1445
    %1496 = vmatprep.subr.mxu0 0.0
    %1497 = vmatpush1.msra.mxu0 %v1444
    %1498 = vmatprep.subr.mxu0 0.0
    %1499 = vmatpush1.msra.mxu0 %v1443
    %1500 = vmatprep.subr.mxu0 0.0
    %1501 = vmatpush1.msra.mxu0 %v1442
    %1502 = vmatprep.subr.mxu0 0.0
    %1503 = vmatpush1.msra.mxu0 %v1441
    %1504 = vmatprep.subr.mxu0 0.0
    %1505 = vmatpush1.msra.mxu0 %v1440
    %1506 = vmatprep.subr.mxu0 0.0
    %1507 = vmatpush1.msra.mxu0 %v1439
    %1508 = vmatprep.subr.mxu0 0.0
    %1509 = vmatpush1.msra.mxu0 %v1438
    %1510 = vmatprep.subr.mxu0 0.0
    %1511 = vmatpush1.msra.mxu0 %v1437
    %1512 = vmatprep.subr.mxu0 0.0
    %1513 = vmatpush1.msra.mxu0 %v1436
    %1514 = vmatprep.subr.mxu0 0.0
    %1515 = vmatpush1.msra.mxu0 %v1435
    %1516 = vmatprep.subr.mxu0 0.0
    %1517 = vmatpush1.msra.mxu0 %v1434
    %1518 = vmatprep.subr.mxu0 0.0
    %1519 = vmatpush1.msra.mxu0 %v1433
    %1520 = vmatprep.subr.mxu0 0.0
    %1521 = vmatpush1.msra.mxu0 %v1432
    %1522 = vmatprep.subr.mxu0 0.0
    %1523 = vmatpush1.msra.mxu0 %v1431
    %1524 = vmatprep.subr.mxu0 0.0
    %1525 = vmatpush1.msra.mxu0 %v1430
    %1526 = vmatprep.subr.mxu0 0.0
    %1527 = vmatpush2.msra.mxu0 %v1461
    %1528 = vmatprep.subr.mxu0 0.0
    %1529 = vmatpush2.msra.mxu0 %v1460
    %1530 = vmatprep.subr.mxu0 0.0
    %1531 = vmatpush2.msra.mxu0 %v1459
    %1532 = vmatprep.subr.mxu0 0.0
    %1533 = vmatpush2.msra.mxu0 %v1458
    %1534 = vmatprep.subr.mxu0 0.0
    %1535 = vmatpush2.msra.mxu0 %v1457
    %1536 = vmatprep.subr.mxu0 0.0
    %1537 = vmatpush2.msra.mxu0 %v1456
    %1538 = vmatprep.subr.mxu0 0.0
    %1539 = vmatpush2.msra.mxu0 %v1455
    %1540 = vmatprep.subr.mxu0 0.0
    %1541 = vmatpush2.msra.mxu0 %v1454
    %1542 = vmatprep.subr.mxu0 0.0
    %1543 = vmatpush2.msra.mxu0 %v1453
    %1544 = vmatprep.subr.mxu0 0.0
    %1545 = vmatpush2.msra.mxu0 %v1452
    %1546 = vmatprep.subr.mxu0 0.0
    %1547 = vmatpush2.msra.mxu0 %v1451
    %1548 = vmatprep.subr.mxu0 0.0
    %1549 = vmatpush2.msra.mxu0 %v1450
    %1550 = vmatprep.subr.mxu0 0.0
    %1551 = vmatpush2.msra.mxu0 %v1449
    %1552 = vmatprep.subr.mxu0 0.0
    %1553 = vmatpush2.msra.mxu0 %v1448
    %1554 = vmatprep.subr.mxu0 0.0
    %1555 = vmatpush2.msra.mxu0 %v1447
    %1556 = vmatprep.subr.mxu0 0.0
    %1557 = vmatpush2.msra.mxu0 %v1446
    %1558 = vmatprep.mubr.f32.mxu0 %v1399
    %1559 = vmatmul.mubr.f32.gmra.mxu0 %v1398
    %v1560 = vpop.f32.mrf.mxu0
    %v1561 = vadd.f32 0.0, %v1560
    %v1562 = vpop.f32.mrf.mxu0
    %1563 = vmatprep.mubr.f32.mxu0 %v1403
    %1564 = vmatmul.mubr.f32.gmra.mxu0 %v1402
    %v1565 = vpop.f32.mrf.mxu0
    %v1566 = vadd.f32 0.0, %v1565
    %v1567 = vpop.f32.mrf.mxu0
    %1568 = vmatprep.mubr.f32.mxu0 %v1407
    %1569 = vmatmul.mubr.f32.gmra.mxu0 %v1406
    %v1570 = vpop.f32.mrf.mxu0
    %v1571 = vadd.f32 0.0, %v1570
    %v1572 = vpop.f32.mrf.mxu0
    %1573 = vmatprep.mubr.f32.mxu0 %v1411
    %1574 = vmatmul.mubr.f32.gmra.mxu0 %v1410
    %v1575 = vpop.f32.mrf.mxu0
    %v1576 = vadd.f32 0.0, %v1575
    %v1577 = vpop.f32.mrf.mxu0
    %1578 = vmatprep.mubr.f32.mxu0 %v1415
    %1579 = vmatmul.mubr.f32.gmra.mxu0 %v1414
    %v1580 = vpop.f32.mrf.mxu0
    %v1581 = vadd.f32 0.0, %v1580
    %v1582 = vpop.f32.mrf.mxu0
    %1583 = vmatprep.mubr.f32.mxu0 %v1419
    %1584 = vmatmul.mubr.f32.gmra.mxu0 %v1418
    %v1585 = vpop.f32.mrf.mxu0
    %v1586 = vadd.f32 0.0, %v1585
    %v1587 = vpop.f32.mrf.mxu0
    %1588 = vmatprep.mubr.f32.mxu0 %v1423
    %1589 = vmatmul.mubr.f32.gmra.mxu0 %v1422
    %v1590 = vpop.f32.mrf.mxu0
    %v1591 = vadd.f32 0.0, %v1590
    %v1592 = vpop.f32.mrf.mxu0
    %1593 = vmatprep.mubr.f32.mxu0 %v1427
    %1594 = vmatmul.mubr.f32.gmra.mxu0 %v1426
    %v1595 = vpop.f32.mrf.mxu0
    %v1596 = vadd.f32 0.0, %v1595
    %v1597 = vpop.f32.mrf.mxu0
    %1598 = vdwg.mxu0
    %1599 = vmatprep.subr.mxu0 0.0
    %1600 = vmatpush1.msra.mxu0 %v1477
    %1601 = vmatprep.subr.mxu0 0.0
    %1602 = vmatpush1.msra.mxu0 %v1476
    %1603 = vmatprep.subr.mxu0 0.0
    %1604 = vmatpush1.msra.mxu0 %v1475
    %1605 = vmatprep.subr.mxu0 0.0
    %1606 = vmatpush1.msra.mxu0 %v1474
    %1607 = vmatprep.subr.mxu0 0.0
    %1608 = vmatpush1.msra.mxu0 %v1473
    %1609 = vmatprep.subr.mxu0 0.0
    %1610 = vmatpush1.msra.mxu0 %v1472
    %1611 = vmatprep.subr.mxu0 0.0
    %1612 = vmatpush1.msra.mxu0 %v1471
    %1613 = vmatprep.subr.mxu0 0.0
    %1614 = vmatpush1.msra.mxu0 %v1470
    %1615 = vmatprep.subr.mxu0 0.0
    %1616 = vmatpush1.msra.mxu0 %v1469
    %1617 = vmatprep.subr.mxu0 0.0
    %1618 = vmatpush1.msra.mxu0 %v1468
    %1619 = vmatprep.subr.mxu0 0.0
    %1620 = vmatpush1.msra.mxu0 %v1467
    %1621 = vmatprep.subr.mxu0 0.0
    %1622 = vmatpush1.msra.mxu0 %v1466
    %1623 = vmatprep.subr.mxu0 0.0
    %1624 = vmatpush1.msra.mxu0 %v1465
    %1625 = vmatprep.subr.mxu0 0.0
    %1626 = vmatpush1.msra.mxu0 %v1464
    %1627 = vmatprep.subr.mxu0 0.0
    %1628 = vmatpush1.msra.mxu0 %v1463
    %1629 = vmatprep.subr.mxu0 0.0
    %1630 = vmatpush1.msra.mxu0 %v1462
    %1631 = vmatprep.subr.mxu0 0.0
    %1632 = vmatpush2.msra.mxu0 %v1493
    %1633 = vmatprep.subr.mxu0 0.0
    %1634 = vmatpush2.msra.mxu0 %v1492
    %1635 = vmatprep.subr.mxu0 0.0
    %1636 = vmatpush2.msra.mxu0 %v1491
    %1637 = vmatprep.subr.mxu0 0.0
    %1638 = vmatpush2.msra.mxu0 %v1490
    %1639 = vmatprep.subr.mxu0 0.0
    %1640 = vmatpush2.msra.mxu0 %v1489
    %1641 = vmatprep.subr.mxu0 0.0
    %1642 = vmatpush2.msra.mxu0 %v1488
    %1643 = vmatprep.subr.mxu0 0.0
    %1644 = vmatpush2.msra.mxu0 %v1487
    %1645 = vmatprep.subr.mxu0 0.0
    %1646 = vmatpush2.msra.mxu0 %v1486
    %1647 = vmatprep.subr.mxu0 0.0
    %1648 = vmatpush2.msra.mxu0 %v1485
    %1649 = vmatprep.subr.mxu0 0.0
    %1650 = vmatpush2.msra.mxu0 %v1484
    %1651 = vmatprep.subr.mxu0 0.0
    %1652 = vmatpush2.msra.mxu0 %v1483
    %1653 = vmatprep.subr.mxu0 0.0
    %1654 = vmatpush2.msra.mxu0 %v1482
    %1655 = vmatprep.subr.mxu0 0.0
    %1656 = vmatpush2.msra.mxu0 %v1481
    %1657 = vmatprep.subr.mxu0 0.0
    %1658 = vmatpush2.msra.mxu0 %v1480
    %1659 = vmatprep.subr.mxu0 0.0
    %1660 = vmatpush2.msra.mxu0 %v1479
    %1661 = vmatprep.subr.mxu0 0.0
    %1662 = vmatpush2.msra.mxu0 %v1478
    %1663 = vmatprep.mubr.f32.mxu0 %v1401
    %1664 = vmatmul.mubr.f32.gmra.mxu0 %v1400
    %v1665 = vpop.f32.mrf.mxu0
    %v1666 = vadd.f32 %v1561, %v1665
    %v1667 = vpop.f32.mrf.mxu0
    %1668 = vmatprep.mubr.f32.mxu0 %v1405
    %1669 = vmatmul.mubr.f32.gmra.mxu0 %v1404
    %v1670 = vpop.f32.mrf.mxu0
    %v1671 = vadd.f32 %v1566, %v1670
    %v1672 = vpop.f32.mrf.mxu0
    %1673 = vmatprep.mubr.f32.mxu0 %v1409
    %1674 = vmatmul.mubr.f32.gmra.mxu0 %v1408
    %v1675 = vpop.f32.mrf.mxu0
    %v1676 = vadd.f32 %v1571, %v1675
    %v1677 = vpop.f32.mrf.mxu0
    %1678 = vmatprep.mubr.f32.mxu0 %v1413
    %1679 = vmatmul.mubr.f32.gmra.mxu0 %v1412
    %v1680 = vpop.f32.mrf.mxu0
    %v1681 = vadd.f32 %v1576, %v1680
    %v1682 = vpop.f32.mrf.mxu0
    %1683 = vmatprep.mubr.f32.mxu0 %v1417
    %1684 = vmatmul.mubr.f32.gmra.mxu0 %v1416
    %v1685 = vpop.f32.mrf.mxu0
    %v1686 = vadd.f32 %v1581, %v1685
    %v1687 = vpop.f32.mrf.mxu0
    %1688 = vmatprep.mubr.f32.mxu0 %v1421
    %1689 = vmatmul.mubr.f32.gmra.mxu0 %v1420
    %v1690 = vpop.f32.mrf.mxu0
    %v1691 = vadd.f32 %v1586, %v1690
    %v1692 = vpop.f32.mrf.mxu0
    %1693 = vmatprep.mubr.f32.mxu0 %v1425
    %1694 = vmatmul.mubr.f32.gmra.mxu0 %v1424
    %v1695 = vpop.f32.mrf.mxu0
    %v1696 = vadd.f32 %v1591, %v1695
    %v1697 = vpop.f32.mrf.mxu0
    %1698 = vmatprep.mubr.f32.mxu0 %v1429
    %1699 = vmatmul.mubr.f32.gmra.mxu0 %v1428
    %v1700 = vpop.f32.mrf.mxu0
    %v1701 = vadd.f32 %v1596, %v1700
    %v1702 = vpop.f32.mrf.mxu0
    %1703 = vdwg.mxu0
    %v1704 = vadd.f32 %v1136, %v1666
    %v1705 = vadd.f32 %v1141, %v1671
    %v1706 = vadd.f32 %v1146, %v1676
    %v1707 = vadd.f32 %v1151, %v1681
    %v1708 = vadd.f32 %v1156, %v1686
    %v1709 = vadd.f32 %v1161, %v1691
    %v1710 = vadd.f32 %v1166, %v1696
    %v1711 = vadd.f32 %v1171, %v1701
    %v1712 = vld [vmem:[%s1 + $0x18] sm:$0xff]
    %v1714 = vlaneseq
    %v1715 = vshrl.u32 %v1714, 7
    %v1716 = vsub.s32 0, %v1715
    %v1717 = vrot.slane %v1712, %v1716
    %v1718 = vlaneseq
    %v1719 = vshrl.u32 %v1718, 7
    %v1720 = vsub.s32 2, %v1719
    %v1721 = vrot.slane %v1712, %v1720
    %v1722 = vlaneseq
    %v1723 = vshrl.u32 %v1722, 7
    %v1724 = vsub.s32 4, %v1723
    %v1725 = vrot.slane %v1712, %v1724
    %v1726 = vlaneseq
    %v1727 = vshrl.u32 %v1726, 7
    %v1728 = vsub.s32 6, %v1727
    %v1729 = vrot.slane %v1712, %v1728
    %v1734 = vlaneseq
    %v1735 = vshrl.u32 %v1734, 7
    %v1736 = vsub.s32 0, %v1735
    %v1737 = vrot.slane %v1717, %v1736
    %v1738 = vlaneseq
    %v1739 = vshrl.u32 %v1738, 7
    %v1740 = vsub.s32 0, %v1739
    %v1741 = vrot.slane %v1721, %v1740
    %v1742 = vlaneseq
    %v1743 = vshrl.u32 %v1742, 7
    %v1744 = vsub.s32 0, %v1743
    %v1745 = vrot.slane %v1725, %v1744
    %v1746 = vlaneseq
    %v1747 = vshrl.u32 %v1746, 7
    %v1748 = vsub.s32 0, %v1747
    %v1749 = vrot.slane %v1729, %v1748
    %v1750 = vmul.f32 %v45, %v1737
    %v1751 = vmul.f32 %v45, %v1741
    %v1752 = vmul.f32 %v45, %v1745
    %v1753 = vmul.f32 %v45, %v1749
    %v1754 = vmul.f32 %v50, %v1737
    %v1755 = vmul.f32 %v50, %v1741
    %v1756 = vmul.f32 %v50, %v1745
    %v1757 = vmul.f32 %v50, %v1749
    %v1758 = vmul.f32 %v55, %v1737
    %v1759 = vmul.f32 %v55, %v1741
    %v1760 = vmul.f32 %v55, %v1745
    %v1761 = vmul.f32 %v55, %v1749
    %v1762 = vmul.f32 %v60, %v1737
    %v1763 = vmul.f32 %v60, %v1741
    %v1764 = vmul.f32 %v60, %v1745
    %v1765 = vmul.f32 %v60, %v1749
    %v1766 = vmul.f32 %v65, %v1737
    %v1767 = vmul.f32 %v65, %v1741
    %v1768 = vmul.f32 %v65, %v1745
    %v1769 = vmul.f32 %v65, %v1749
    %v1770 = vmul.f32 %v70, %v1737
    %v1771 = vmul.f32 %v70, %v1741
    %v1772 = vmul.f32 %v70, %v1745
    %v1773 = vmul.f32 %v70, %v1749
    %v1774 = vmul.f32 %v75, %v1737
    %v1775 = vmul.f32 %v75, %v1741
    %v1776 = vmul.f32 %v75, %v1745
    %v1777 = vmul.f32 %v75, %v1749
    %v1778 = vmul.f32 %v80, %v1737
    %v1779 = vmul.f32 %v80, %v1741
    %v1780 = vmul.f32 %v80, %v1745
    %v1781 = vmul.f32 %v80, %v1749
    %v1782 = vlaneseq
    %v1783 = vshrl.u32 %v1782, 7
    %v1784 = vsub.s32 1, %v1783
    %v1785 = vrot.slane %v1712, %v1784
    %v1786 = vlaneseq
    %v1787 = vshrl.u32 %v1786, 7
    %v1788 = vsub.s32 3, %v1787
    %v1789 = vrot.slane %v1712, %v1788
    %v1790 = vlaneseq
    %v1791 = vshrl.u32 %v1790, 7
    %v1792 = vsub.s32 5, %v1791
    %v1793 = vrot.slane %v1712, %v1792
    %v1794 = vlaneseq
    %v1795 = vshrl.u32 %v1794, 7
    %v1796 = vsub.s32 7, %v1795
    %v1797 = vrot.slane %v1712, %v1796
    %v1802 = vlaneseq
    %v1803 = vshrl.u32 %v1802, 7
    %v1804 = vsub.s32 1, %v1803
    %v1805 = vrot.slane %v1785, %v1804
    %v1806 = vlaneseq
    %v1807 = vshrl.u32 %v1806, 7
    %v1808 = vsub.s32 1, %v1807
    %v1809 = vrot.slane %v1789, %v1808
    %v1810 = vlaneseq
    %v1811 = vshrl.u32 %v1810, 7
    %v1812 = vsub.s32 1, %v1811
    %v1813 = vrot.slane %v1793, %v1812
    %v1814 = vlaneseq
    %v1815 = vshrl.u32 %v1814, 7
    %v1816 = vsub.s32 1, %v1815
    %v1817 = vrot.slane %v1797, %v1816
    %v1818 = vmul.f32 %v84, %v1805
    %v1819 = vmul.f32 %v84, %v1809
    %v1820 = vmul.f32 %v84, %v1813
    %v1821 = vmul.f32 %v84, %v1817
    %v1822 = vmul.f32 %v88, %v1805
    %v1823 = vmul.f32 %v88, %v1809
    %v1824 = vmul.f32 %v88, %v1813
    %v1825 = vmul.f32 %v88, %v1817
    %v1826 = vmul.f32 %v92, %v1805
    %v1827 = vmul.f32 %v92, %v1809
    %v1828 = vmul.f32 %v92, %v1813
    %v1829 = vmul.f32 %v92, %v1817
    %v1830 = vmul.f32 %v96, %v1805
    %v1831 = vmul.f32 %v96, %v1809
    %v1832 = vmul.f32 %v96, %v1813
    %v1833 = vmul.f32 %v96, %v1817
    %v1834 = vmul.f32 %v100, %v1805
    %v1835 = vmul.f32 %v100, %v1809
    %v1836 = vmul.f32 %v100, %v1813
    %v1837 = vmul.f32 %v100, %v1817
    %v1838 = vmul.f32 %v104, %v1805
    %v1839 = vmul.f32 %v104, %v1809
    %v1840 = vmul.f32 %v104, %v1813
    %v1841 = vmul.f32 %v104, %v1817
    %v1842 = vmul.f32 %v108, %v1805
    %v1843 = vmul.f32 %v108, %v1809
    %v1844 = vmul.f32 %v108, %v1813
    %v1845 = vmul.f32 %v108, %v1817
    %v1846 = vmul.f32 %v112, %v1805
    %v1847 = vmul.f32 %v112, %v1809
    %v1848 = vmul.f32 %v112, %v1813
    %v1849 = vmul.f32 %v112, %v1817
    %v1850 = vadd.f32 %v1750, %v1818
    %v1851 = vadd.f32 %v1751, %v1819
    %v1852 = vadd.f32 %v1752, %v1820
    %v1853 = vadd.f32 %v1753, %v1821
    %v1854 = vadd.f32 %v1754, %v1822
    %v1855 = vadd.f32 %v1755, %v1823
    %v1856 = vadd.f32 %v1756, %v1824
    %v1857 = vadd.f32 %v1757, %v1825
    %v1858 = vadd.f32 %v1758, %v1826
    %v1859 = vadd.f32 %v1759, %v1827
    %v1860 = vadd.f32 %v1760, %v1828
    %v1861 = vadd.f32 %v1761, %v1829
    %v1862 = vadd.f32 %v1762, %v1830
    %v1863 = vadd.f32 %v1763, %v1831
    %v1864 = vadd.f32 %v1764, %v1832
    %v1865 = vadd.f32 %v1765, %v1833
    %v1866 = vadd.f32 %v1766, %v1834
    %v1867 = vadd.f32 %v1767, %v1835
    %v1868 = vadd.f32 %v1768, %v1836
    %v1869 = vadd.f32 %v1769, %v1837
    %v1870 = vadd.f32 %v1770, %v1838
    %v1871 = vadd.f32 %v1771, %v1839
    %v1872 = vadd.f32 %v1772, %v1840
    %v1873 = vadd.f32 %v1773, %v1841
    %v1874 = vadd.f32 %v1774, %v1842
    %v1875 = vadd.f32 %v1775, %v1843
    %v1876 = vadd.f32 %v1776, %v1844
    %v1877 = vadd.f32 %v1777, %v1845
    %v1878 = vadd.f32 %v1778, %v1846
    %v1879 = vadd.f32 %v1779, %v1847
    %v1880 = vadd.f32 %v1780, %v1848
    %v1881 = vadd.f32 %v1781, %v1849
    %v1882 = vld [vmem:[%s2 + $0xc] sm:$0xf]
    %v1884 = vlaneseq
    %v1885 = vshrl.u32 %v1884, 7
    %v1886 = vsub.s32 0, %v1885
    %v1887 = vrot.slane %v1882, %v1886
    %v1888 = vlaneseq
    %v1889 = vshrl.u32 %v1888, 7
    %v1890 = vsub.s32 1, %v1889
    %v1891 = vrot.slane %v1882, %v1890
    %v1892 = vlaneseq
    %v1893 = vshrl.u32 %v1892, 7
    %v1894 = vsub.s32 2, %v1893
    %v1895 = vrot.slane %v1882, %v1894
    %v1896 = vlaneseq
    %v1897 = vshrl.u32 %v1896, 7
    %v1898 = vsub.s32 3, %v1897
    %v1899 = vrot.slane %v1882, %v1898
    %v1904 = vadd.f32 %v1850, %v1887
    %v1905 = vadd.f32 %v1851, %v1891
    %v1906 = vadd.f32 %v1852, %v1895
    %v1907 = vadd.f32 %v1853, %v1899
    %v1908 = vadd.f32 %v1854, %v1887
    %v1909 = vadd.f32 %v1855, %v1891
    %v1910 = vadd.f32 %v1856, %v1895
    %v1911 = vadd.f32 %v1857, %v1899
    %v1912 = vadd.f32 %v1858, %v1887
    %v1913 = vadd.f32 %v1859, %v1891
    %v1914 = vadd.f32 %v1860, %v1895
    %v1915 = vadd.f32 %v1861, %v1899
    %v1916 = vadd.f32 %v1862, %v1887
    %v1917 = vadd.f32 %v1863, %v1891
    %v1918 = vadd.f32 %v1864, %v1895
    %v1919 = vadd.f32 %v1865, %v1899
    %v1920 = vadd.f32 %v1866, %v1887
    %v1921 = vadd.f32 %v1867, %v1891
    %v1922 = vadd.f32 %v1868, %v1895
    %v1923 = vadd.f32 %v1869, %v1899
    %v1924 = vadd.f32 %v1870, %v1887
    %v1925 = vadd.f32 %v1871, %v1891
    %v1926 = vadd.f32 %v1872, %v1895
    %v1927 = vadd.f32 %v1873, %v1899
    %v1928 = vadd.f32 %v1874, %v1887
    %v1929 = vadd.f32 %v1875, %v1891
    %v1930 = vadd.f32 %v1876, %v1895
    %v1931 = vadd.f32 %v1877, %v1899
    %v1932 = vadd.f32 %v1878, %v1887
    %v1933 = vadd.f32 %v1879, %v1891
    %v1934 = vadd.f32 %v1880, %v1895
    %v1935 = vadd.f32 %v1881, %v1899
    %v1936 = vmax.f32 %v1904, 0.0
    %v1937 = vmax.f32 %v1905, 0.0
    %v1938 = vmax.f32 %v1906, 0.0
    %v1939 = vmax.f32 %v1907, 0.0
    %v1940 = vmax.f32 %v1908, 0.0
    %v1941 = vmax.f32 %v1909, 0.0
    %v1942 = vmax.f32 %v1910, 0.0
    %v1943 = vmax.f32 %v1911, 0.0
    %v1944 = vmax.f32 %v1912, 0.0
    %v1945 = vmax.f32 %v1913, 0.0
    %v1946 = vmax.f32 %v1914, 0.0
    %v1947 = vmax.f32 %v1915, 0.0
    %v1948 = vmax.f32 %v1916, 0.0
    %v1949 = vmax.f32 %v1917, 0.0
    %v1950 = vmax.f32 %v1918, 0.0
    %v1951 = vmax.f32 %v1919, 0.0
    %v1952 = vmax.f32 %v1920, 0.0
    %v1953 = vmax.f32 %v1921, 0.0
    %v1954 = vmax.f32 %v1922, 0.0
    %v1955 = vmax.f32 %v1923, 0.0
    %v1956 = vmax.f32 %v1924, 0.0
    %v1957 = vmax.f32 %v1925, 0.0
    %v1958 = vmax.f32 %v1926, 0.0
    %v1959 = vmax.f32 %v1927, 0.0
    %v1960 = vmax.f32 %v1928, 0.0
    %v1961 = vmax.f32 %v1929, 0.0
    %v1962 = vmax.f32 %v1930, 0.0
    %v1963 = vmax.f32 %v1931, 0.0
    %v1964 = vmax.f32 %v1932, 0.0
    %v1965 = vmax.f32 %v1933, 0.0
    %v1966 = vmax.f32 %v1934, 0.0
    %v1967 = vmax.f32 %v1935, 0.0
    %v1968 = vld [vmem:[#allocation2 + $0x600] sm:$0xff]
    %v1969 = vld [vmem:[#allocation2 + $0x608] sm:$0xff]
    %v1970 = vld [vmem:[#allocation2 + $0x610] sm:$0xff]
    %v1971 = vld [vmem:[#allocation2 + $0x618] sm:$0xff]
    %v1972 = vld [vmem:[#allocation2 + $0x620] sm:$0xff]
    %v1973 = vld [vmem:[#allocation2 + $0x628] sm:$0xff]
    %v1974 = vld [vmem:[#allocation2 + $0x630] sm:$0xff]
    %v1975 = vld [vmem:[#allocation2 + $0x638] sm:$0xff]
    %v1976 = vld [vmem:[#allocation2 + $0x640] sm:$0xff]
    %v1977 = vld [vmem:[#allocation2 + $0x648] sm:$0xff]
    %v1978 = vld [vmem:[#allocation2 + $0x650] sm:$0xff]
    %v1979 = vld [vmem:[#allocation2 + $0x658] sm:$0xff]
    %v1980 = vld [vmem:[#allocation2 + $0x660] sm:$0xff]
    %v1981 = vld [vmem:[#allocation2 + $0x668] sm:$0xff]
    %v1982 = vld [vmem:[#allocation2 + $0x670] sm:$0xff]
    %v1983 = vld [vmem:[#allocation2 + $0x678] sm:$0xff]
    %v1984 = vld [vmem:[#allocation2 + $0x680] sm:$0xff]
    %v1985 = vld [vmem:[#allocation2 + $0x688] sm:$0xff]
    %v1986 = vld [vmem:[#allocation2 + $0x690] sm:$0xff]
    %v1987 = vld [vmem:[#allocation2 + $0x698] sm:$0xff]
    %v1988 = vld [vmem:[#allocation2 + $0x6a0] sm:$0xff]
    %v1989 = vld [vmem:[#allocation2 + $0x6a8] sm:$0xff]
    %v1990 = vld [vmem:[#allocation2 + $0x6b0] sm:$0xff]
    %v1991 = vld [vmem:[#allocation2 + $0x6b8] sm:$0xff]
    %v1992 = vld [vmem:[#allocation2 + $0x6c0] sm:$0xff]
    %v1993 = vld [vmem:[#allocation2 + $0x6c8] sm:$0xff]
    %v1994 = vld [vmem:[#allocation2 + $0x6d0] sm:$0xff]
    %v1995 = vld [vmem:[#allocation2 + $0x6d8] sm:$0xff]
    %v1996 = vld [vmem:[#allocation2 + $0x6e0] sm:$0xff]
    %v1997 = vld [vmem:[#allocation2 + $0x6e8] sm:$0xff]
    %v1998 = vld [vmem:[#allocation2 + $0x6f0] sm:$0xff]
    %v1999 = vld [vmem:[#allocation2 + $0x6f8] sm:$0xff]
    %v2000 = vld [vmem:[#allocation2 + $0x700] sm:$0xff]
    %v2001 = vld [vmem:[#allocation2 + $0x708] sm:$0xff]
    %v2002 = vld [vmem:[#allocation2 + $0x710] sm:$0xff]
    %v2003 = vld [vmem:[#allocation2 + $0x718] sm:$0xff]
    %v2004 = vld [vmem:[#allocation2 + $0x720] sm:$0xff]
    %v2005 = vld [vmem:[#allocation2 + $0x728] sm:$0xff]
    %v2006 = vld [vmem:[#allocation2 + $0x730] sm:$0xff]
    %v2007 = vld [vmem:[#allocation2 + $0x738] sm:$0xff]
    %v2008 = vld [vmem:[#allocation2 + $0x740] sm:$0xff]
    %v2009 = vld [vmem:[#allocation2 + $0x748] sm:$0xff]
    %v2010 = vld [vmem:[#allocation2 + $0x750] sm:$0xff]
    %v2011 = vld [vmem:[#allocation2 + $0x758] sm:$0xff]
    %v2012 = vld [vmem:[#allocation2 + $0x760] sm:$0xff]
    %v2013 = vld [vmem:[#allocation2 + $0x768] sm:$0xff]
    %v2014 = vld [vmem:[#allocation2 + $0x770] sm:$0xff]
    %v2015 = vld [vmem:[#allocation2 + $0x778] sm:$0xff]
    %v2016 = vld [vmem:[#allocation2 + $0x780] sm:$0xff]
    %v2017 = vld [vmem:[#allocation2 + $0x788] sm:$0xff]
    %v2018 = vld [vmem:[#allocation2 + $0x790] sm:$0xff]
    %v2019 = vld [vmem:[#allocation2 + $0x798] sm:$0xff]
    %v2020 = vld [vmem:[#allocation2 + $0x7a0] sm:$0xff]
    %v2021 = vld [vmem:[#allocation2 + $0x7a8] sm:$0xff]
    %v2022 = vld [vmem:[#allocation2 + $0x7b0] sm:$0xff]
    %v2023 = vld [vmem:[#allocation2 + $0x7b8] sm:$0xff]
    %v2024 = vld [vmem:[#allocation2 + $0x7c0] sm:$0xff]
    %v2025 = vld [vmem:[#allocation2 + $0x7c8] sm:$0xff]
    %v2026 = vld [vmem:[#allocation2 + $0x7d0] sm:$0xff]
    %v2027 = vld [vmem:[#allocation2 + $0x7d8] sm:$0xff]
    %v2028 = vld [vmem:[#allocation2 + $0x7e0] sm:$0xff]
    %v2029 = vld [vmem:[#allocation2 + $0x7e8] sm:$0xff]
    %v2030 = vld [vmem:[#allocation2 + $0x7f0] sm:$0xff]
    %v2031 = vld [vmem:[#allocation2 + $0x7f8] sm:$0xff]
    %2032 = vmatprep.subr.mxu0 0.0
    %2033 = vmatpush1.msra.mxu0 %v1983
    %2034 = vmatprep.subr.mxu0 0.0
    %2035 = vmatpush1.msra.mxu0 %v1982
    %2036 = vmatprep.subr.mxu0 0.0
    %2037 = vmatpush1.msra.mxu0 %v1981
    %2038 = vmatprep.subr.mxu0 0.0
    %2039 = vmatpush1.msra.mxu0 %v1980
    %2040 = vmatprep.subr.mxu0 0.0
    %2041 = vmatpush1.msra.mxu0 %v1979
    %2042 = vmatprep.subr.mxu0 0.0
    %2043 = vmatpush1.msra.mxu0 %v1978
    %2044 = vmatprep.subr.mxu0 0.0
    %2045 = vmatpush1.msra.mxu0 %v1977
    %2046 = vmatprep.subr.mxu0 0.0
    %2047 = vmatpush1.msra.mxu0 %v1976
    %2048 = vmatprep.subr.mxu0 0.0
    %2049 = vmatpush1.msra.mxu0 %v1975
    %2050 = vmatprep.subr.mxu0 0.0
    %2051 = vmatpush1.msra.mxu0 %v1974
    %2052 = vmatprep.subr.mxu0 0.0
    %2053 = vmatpush1.msra.mxu0 %v1973
    %2054 = vmatprep.subr.mxu0 0.0
    %2055 = vmatpush1.msra.mxu0 %v1972
    %2056 = vmatprep.subr.mxu0 0.0
    %2057 = vmatpush1.msra.mxu0 %v1971
    %2058 = vmatprep.subr.mxu0 0.0
    %2059 = vmatpush1.msra.mxu0 %v1970
    %2060 = vmatprep.subr.mxu0 0.0
    %2061 = vmatpush1.msra.mxu0 %v1969
    %2062 = vmatprep.subr.mxu0 0.0
    %2063 = vmatpush1.msra.mxu0 %v1968
    %2064 = vmatprep.subr.mxu0 0.0
    %2065 = vmatpush2.msra.mxu0 %v1999
    %2066 = vmatprep.subr.mxu0 0.0
    %2067 = vmatpush2.msra.mxu0 %v1998
    %2068 = vmatprep.subr.mxu0 0.0
    %2069 = vmatpush2.msra.mxu0 %v1997
    %2070 = vmatprep.subr.mxu0 0.0
    %2071 = vmatpush2.msra.mxu0 %v1996
    %2072 = vmatprep.subr.mxu0 0.0
    %2073 = vmatpush2.msra.mxu0 %v1995
    %2074 = vmatprep.subr.mxu0 0.0
    %2075 = vmatpush2.msra.mxu0 %v1994
    %2076 = vmatprep.subr.mxu0 0.0
    %2077 = vmatpush2.msra.mxu0 %v1993
    %2078 = vmatprep.subr.mxu0 0.0
    %2079 = vmatpush2.msra.mxu0 %v1992
    %2080 = vmatprep.subr.mxu0 0.0
    %2081 = vmatpush2.msra.mxu0 %v1991
    %2082 = vmatprep.subr.mxu0 0.0
    %2083 = vmatpush2.msra.mxu0 %v1990
    %2084 = vmatprep.subr.mxu0 0.0
    %2085 = vmatpush2.msra.mxu0 %v1989
    %2086 = vmatprep.subr.mxu0 0.0
    %2087 = vmatpush2.msra.mxu0 %v1988
    %2088 = vmatprep.subr.mxu0 0.0
    %2089 = vmatpush2.msra.mxu0 %v1987
    %2090 = vmatprep.subr.mxu0 0.0
    %2091 = vmatpush2.msra.mxu0 %v1986
    %2092 = vmatprep.subr.mxu0 0.0
    %2093 = vmatpush2.msra.mxu0 %v1985
    %2094 = vmatprep.subr.mxu0 0.0
    %2095 = vmatpush2.msra.mxu0 %v1984
    %2096 = vmatprep.mubr.f32.mxu0 %v1937
    %2097 = vmatmul.mubr.f32.gmra.mxu0 %v1936
    %v2098 = vpop.f32.mrf.mxu0
    %v2099 = vadd.f32 0.0, %v2098
    %v2100 = vpop.f32.mrf.mxu0
    %2101 = vmatprep.mubr.f32.mxu0 %v1941
    %2102 = vmatmul.mubr.f32.gmra.mxu0 %v1940
    %v2103 = vpop.f32.mrf.mxu0
    %v2104 = vadd.f32 0.0, %v2103
    %v2105 = vpop.f32.mrf.mxu0
    %2106 = vmatprep.mubr.f32.mxu0 %v1945
    %2107 = vmatmul.mubr.f32.gmra.mxu0 %v1944
    %v2108 = vpop.f32.mrf.mxu0
    %v2109 = vadd.f32 0.0, %v2108
    %v2110 = vpop.f32.mrf.mxu0
    %2111 = vmatprep.mubr.f32.mxu0 %v1949
    %2112 = vmatmul.mubr.f32.gmra.mxu0 %v1948
    %v2113 = vpop.f32.mrf.mxu0
    %v2114 = vadd.f32 0.0, %v2113
    %v2115 = vpop.f32.mrf.mxu0
    %2116 = vmatprep.mubr.f32.mxu0 %v1953
    %2117 = vmatmul.mubr.f32.gmra.mxu0 %v1952
    %v2118 = vpop.f32.mrf.mxu0
    %v2119 = vadd.f32 0.0, %v2118
    %v2120 = vpop.f32.mrf.mxu0
    %2121 = vmatprep.mubr.f32.mxu0 %v1957
    %2122 = vmatmul.mubr.f32.gmra.mxu0 %v1956
    %v2123 = vpop.f32.mrf.mxu0
    %v2124 = vadd.f32 0.0, %v2123
    %v2125 = vpop.f32.mrf.mxu0
    %2126 = vmatprep.mubr.f32.mxu0 %v1961
    %2127 = vmatmul.mubr.f32.gmra.mxu0 %v1960
    %v2128 = vpop.f32.mrf.mxu0
    %v2129 = vadd.f32 0.0, %v2128
    %v2130 = vpop.f32.mrf.mxu0
    %2131 = vmatprep.mubr.f32.mxu0 %v1965
    %2132 = vmatmul.mubr.f32.gmra.mxu0 %v1964
    %v2133 = vpop.f32.mrf.mxu0
    %v2134 = vadd.f32 0.0, %v2133
    %v2135 = vpop.f32.mrf.mxu0
    %2136 = vdwg.mxu0
    %2137 = vmatprep.subr.mxu0 0.0
    %2138 = vmatpush1.msra.mxu0 %v2015
    %2139 = vmatprep.subr.mxu0 0.0
    %2140 = vmatpush1.msra.mxu0 %v2014
    %2141 = vmatprep.subr.mxu0 0.0
    %2142 = vmatpush1.msra.mxu0 %v2013
    %2143 = vmatprep.subr.mxu0 0.0
    %2144 = vmatpush1.msra.mxu0 %v2012
    %2145 = vmatprep.subr.mxu0 0.0
    %2146 = vmatpush1.msra.mxu0 %v2011
    %2147 = vmatprep.subr.mxu0 0.0
    %2148 = vmatpush1.msra.mxu0 %v2010
    %2149 = vmatprep.subr.mxu0 0.0
    %2150 = vmatpush1.msra.mxu0 %v2009
    %2151 = vmatprep.subr.mxu0 0.0
    %2152 = vmatpush1.msra.mxu0 %v2008
    %2153 = vmatprep.subr.mxu0 0.0
    %2154 = vmatpush1.msra.mxu0 %v2007
    %2155 = vmatprep.subr.mxu0 0.0
    %2156 = vmatpush1.msra.mxu0 %v2006
    %2157 = vmatprep.subr.mxu0 0.0
    %2158 = vmatpush1.msra.mxu0 %v2005
    %2159 = vmatprep.subr.mxu0 0.0
    %2160 = vmatpush1.msra.mxu0 %v2004
    %2161 = vmatprep.subr.mxu0 0.0
    %2162 = vmatpush1.msra.mxu0 %v2003
    %2163 = vmatprep.subr.mxu0 0.0
    %2164 = vmatpush1.msra.mxu0 %v2002
    %2165 = vmatprep.subr.mxu0 0.0
    %2166 = vmatpush1.msra.mxu0 %v2001
    %2167 = vmatprep.subr.mxu0 0.0
    %2168 = vmatpush1.msra.mxu0 %v2000
    %2169 = vmatprep.subr.mxu0 0.0
    %2170 = vmatpush2.msra.mxu0 %v2031
    %2171 = vmatprep.subr.mxu0 0.0
    %2172 = vmatpush2.msra.mxu0 %v2030
    %2173 = vmatprep.subr.mxu0 0.0
    %2174 = vmatpush2.msra.mxu0 %v2029
    %2175 = vmatprep.subr.mxu0 0.0
    %2176 = vmatpush2.msra.mxu0 %v2028
    %2177 = vmatprep.subr.mxu0 0.0
    %2178 = vmatpush2.msra.mxu0 %v2027
    %2179 = vmatprep.subr.mxu0 0.0
    %2180 = vmatpush2.msra.mxu0 %v2026
    %2181 = vmatprep.subr.mxu0 0.0
    %2182 = vmatpush2.msra.mxu0 %v2025
    %2183 = vmatprep.subr.mxu0 0.0
    %2184 = vmatpush2.msra.mxu0 %v2024
    %2185 = vmatprep.subr.mxu0 0.0
    %2186 = vmatpush2.msra.mxu0 %v2023
    %2187 = vmatprep.subr.mxu0 0.0
    %2188 = vmatpush2.msra.mxu0 %v2022
    %2189 = vmatprep.subr.mxu0 0.0
    %2190 = vmatpush2.msra.mxu0 %v2021
    %2191 = vmatprep.subr.mxu0 0.0
    %2192 = vmatpush2.msra.mxu0 %v2020
    %2193 = vmatprep.subr.mxu0 0.0
    %2194 = vmatpush2.msra.mxu0 %v2019
    %2195 = vmatprep.subr.mxu0 0.0
    %2196 = vmatpush2.msra.mxu0 %v2018
    %2197 = vmatprep.subr.mxu0 0.0
    %2198 = vmatpush2.msra.mxu0 %v2017
    %2199 = vmatprep.subr.mxu0 0.0
    %2200 = vmatpush2.msra.mxu0 %v2016
    %2201 = vmatprep.mubr.f32.mxu0 %v1939
    %2202 = vmatmul.mubr.f32.gmra.mxu0 %v1938
    %v2203 = vpop.f32.mrf.mxu0
    %v2204 = vadd.f32 %v2099, %v2203
    %v2205 = vpop.f32.mrf.mxu0
    %2206 = vmatprep.mubr.f32.mxu0 %v1943
    %2207 = vmatmul.mubr.f32.gmra.mxu0 %v1942
    %v2208 = vpop.f32.mrf.mxu0
    %v2209 = vadd.f32 %v2104, %v2208
    %v2210 = vpop.f32.mrf.mxu0
    %2211 = vmatprep.mubr.f32.mxu0 %v1947
    %2212 = vmatmul.mubr.f32.gmra.mxu0 %v1946
    %v2213 = vpop.f32.mrf.mxu0
    %v2214 = vadd.f32 %v2109, %v2213
    %v2215 = vpop.f32.mrf.mxu0
    %2216 = vmatprep.mubr.f32.mxu0 %v1951
    %2217 = vmatmul.mubr.f32.gmra.mxu0 %v1950
    %v2218 = vpop.f32.mrf.mxu0
    %v2219 = vadd.f32 %v2114, %v2218
    %v2220 = vpop.f32.mrf.mxu0
    %2221 = vmatprep.mubr.f32.mxu0 %v1955
    %2222 = vmatmul.mubr.f32.gmra.mxu0 %v1954
    %v2223 = vpop.f32.mrf.mxu0
    %v2224 = vadd.f32 %v2119, %v2223
    %v2225 = vpop.f32.mrf.mxu0
    %2226 = vmatprep.mubr.f32.mxu0 %v1959
    %2227 = vmatmul.mubr.f32.gmra.mxu0 %v1958
    %v2228 = vpop.f32.mrf.mxu0
    %v2229 = vadd.f32 %v2124, %v2228
    %v2230 = vpop.f32.mrf.mxu0
    %2231 = vmatprep.mubr.f32.mxu0 %v1963
    %2232 = vmatmul.mubr.f32.gmra.mxu0 %v1962
    %v2233 = vpop.f32.mrf.mxu0
    %v2234 = vadd.f32 %v2129, %v2233
    %v2235 = vpop.f32.mrf.mxu0
    %2236 = vmatprep.mubr.f32.mxu0 %v1967
    %2237 = vmatmul.mubr.f32.gmra.mxu0 %v1966
    %v2238 = vpop.f32.mrf.mxu0
    %v2239 = vadd.f32 %v2134, %v2238
    %v2240 = vpop.f32.mrf.mxu0
    %2241 = vdwg.mxu0
    %v2242 = vadd.f32 %v1704, %v2204
    %v2243 = vadd.f32 %v1705, %v2209
    %v2244 = vadd.f32 %v1706, %v2214
    %v2245 = vadd.f32 %v1707, %v2219
    %v2246 = vadd.f32 %v1708, %v2224
    %v2247 = vadd.f32 %v1709, %v2229
    %v2248 = vadd.f32 %v1710, %v2234
    %v2249 = vadd.f32 %v1711, %v2239
    %v2250 = vld [vmem:[%s4] sm:$0x1]
    %v2252 = vlaneseq
    %v2253 = vshrl.u32 %v2252, 7
    %v2254 = vsub.s32 0, %v2253
    %v2255 = vrot.slane %v2250, %v2254
    %v2257 = vadd.f32 %v2242, %v2255
    %v2258 = vadd.f32 %v2243, %v2255
    %v2259 = vadd.f32 %v2244, %v2255
    %v2260 = vadd.f32 %v2245, %v2255
    %v2261 = vadd.f32 %v2246, %v2255
    %v2262 = vadd.f32 %v2247, %v2255
    %v2263 = vadd.f32 %v2248, %v2255
    %v2264 = vadd.f32 %v2249, %v2255
    %vm2265 = vcmask 23552
    %2266 = vst.msk [vmem:[%s5] sm:$0xff] %vm2265, %v2257
    %2267 = vst.msk [vmem:[%s5 + $0x8] sm:$0xff] %vm2265, %v2258
    %2268 = vst.msk [vmem:[%s5 + $0x10] sm:$0xff] %vm2265, %v2259
    %2269 = vst.msk [vmem:[%s5 + $0x18] sm:$0xff] %vm2265, %v2260
    %2270 = vst.msk [vmem:[%s5 + $0x20] sm:$0xff] %vm2265, %v2261
    %2271 = vst.msk [vmem:[%s5 + $0x28] sm:$0xff] %vm2265, %v2262
    %2272 = vst.msk [vmem:[%s5 + $0x30] sm:$0xff] %vm2265, %v2263
    %2273 = vst.msk [vmem:[%s5 + $0x38] sm:$0xff] %vm2265, %v2264
    // Predicated region
    $region26: #{tpu_custom_call.1} parent=1 // pred_check
      _
    $region27: #{tpu_custom_call.1} parent=1 // pred_check_branch
      %2275 = sbr.rel (0) target = $region29
    $region28: #{tpu_custom_call.1} parent=1 // pred_region
      _
    $region29: #{tpu_custom_call.1} parent=1 // pred_fallthru
      _
    // Predicated region
    $region30: #{tpu_custom_call.1} parent=1 // pred_check
      _
    $region31: #{tpu_custom_call.1} parent=1 // pred_check_branch
      %2277 = sbr.rel (0) target = $region33
    $region32: #{tpu_custom_call.1} parent=1 // pred_region
      _
    $region33: #{tpu_custom_call.1} parent=1 // pred_fallthru
      _
    %2278 = vsyncpa [#allocation3], 1

</llo_original>
